<compile_context>
chip_gen: v7x
topology: tpu7x:2x2x1
jax: 0.10.0
libtpu: 0.0.40
codegen_flags: <defaults>
</compile_context>

<pallas_src>
import numpy as np
import jax
import jax.numpy as jnp
from jax import lax
from jax.experimental import pallas as pl
from jax.experimental.pallas import tpu as pltpu


def _round_up(x, m):
    return ((x + m - 1) // m) * m


def _make_kernel(H, G, T_pad, tc, Bt):
    """Bidirectional GRU recurrence over one batch tile, chunked over time."""
    H2 = 2 * H
    f32 = jnp.float32

    def kernel(lens_ref, emb_ref, wih_ref, bih_ref, whh_ref, bn_ref,
               fcw_ref, fcb_ref, out_ref, h_ref, gx_ref):
        i = pl.program_id(1)            # time-chunk axis ("arbitrary", carries h)
        nc = pl.num_programs(1)

        @pl.when(i == 0)
        def _init():
            h_ref[...] = jnp.zeros_like(h_ref)

        # ---- per-chunk x-projection for BOTH directions on the chunk just DMA'd:
        # (tc*Bt, 2H) @ (2H, 3G), f32 accumulation. Off the serial critical path.
        gx_ref[...] = (
            jnp.dot(emb_ref[...].astype(f32), wih_ref[...],
                    preferred_element_type=f32)
            + bih_ref[...])

        # Small loop invariants, hoisted out of the recurrence.
        lens = lens_ref[...]                                   # (Bt, 1) int32
        bn = bn_ref[...]                                       # (1, G)  f32
        lane = lax.broadcasted_iota(jnp.int32, (1, G), 1)
        t0 = i * tc
        frozen = jnp.int32(2 ** 30)

        def step(j, h):
            t = t0 + j
            row0 = pl.multiple_of(j * Bt, Bt)
            gx = gx_ref[pl.ds(row0, Bt), :]                    # (Bt, 3G)
            # One fused block-diagonal recurrent matmul for fwd+bwd. whh is read
            # from VMEM each step instead of being held live across the loop
            # (keeps vreg pressure low; review item for H >= 128).
            hh = jnp.dot(h, whh_ref[...], preferred_element_type=f32)
            r = jax.nn.sigmoid(gx[:, :G] + hh[:, :G])
            z = jax.nn.sigmoid(gx[:, G:2 * G] + hh[:, G:2 * G])
            n = jnp.tanh(gx[:, 2 * G:] + r * (hh[:, 2 * G:] + bn))
            h_new = (1.0 - z) * n + z * h
            # lanes [0:H]  = forward  direction, processing global time t
            # lanes [H:2H] = backward direction, processing global time T_pad-1-t
            # lanes [2H:G] = padding, never updated (stays exactly 0)
            thr = jnp.where(lane < H, t,
                            jnp.where(lane < H2, T_pad - 1 - t, frozen))
            return jnp.where(lens > thr, h_new, h)             # freeze once t>=len

        # TODO(synk): scalar-prefetch seq_lengths and pl.when-skip chunks where
        # both directions are fully frozen (wins when T_pad >> max(len)).
        h = lax.fori_loop(0, tc, step, h_ref[...],
                          unroll=(tc if tc <= 8 else 4))
        h_ref[...] = h

        # Final chunk: fused FC on the [forward | backward] final state. The fc
        # weight rows are pre-arranged to match the lane layout -> no concat.
        @pl.when(i == nc - 1)
        def _finalize():
            out_ref[...] = (jnp.dot(h, fcw_ref[...], preferred_element_type=f32)
                            + fcb_ref[...])

    return kernel


def rnn_classifier_forward(token_ids, seq_lengths, params, *, t_chunk=128):
    """token_ids: (B, T) int32, seq_lengths: (B,) int32 (sorted or not)."""
    B, T = token_ids.shape
    H = params["emb_table"].shape[1]
    O = params["fc_w"].shape[0]
    H2 = 2 * H
    G = _round_up(H2, 128)            # lane-aligned per-gate group width
    O_pad = _round_up(O, 128)         # lane-dense FC output
    f32 = jnp.float32

    # Sublane-aligned batch; leading "parallel" axis for v7x's 2 TensorCores.
    B_pad = _round_up(B, 8)
    if B_pad >= 16 and (B_pad // 2) % 8 == 0:
        Bt = B_pad // 2
    else:
        Bt = B_pad
    nb = B_pad // Bt

    tc = max(1, min(t_chunk, T))
    nc = -(-T // tc)
    T_pad = nc * tc

    # ---- embedding gather + (forward || time-reversed) stream, bf16 streamed ----
    # TODO(synk): fold the embedding gather itself into the kernel via scalar-
    # prefetched token ids to also remove the (T, B, 2H) HBM round trip.
    emb = jnp.take(params["emb_table"], token_ids, axis=0)           # (B, T, H) f32
    emb = jnp.transpose(emb, (1, 0, 2))                              # (T, B, H)
    emb = jnp.pad(emb, ((0, T_pad - T), (0, B_pad - B), (0, 0)))
    emb_cat = jnp.concatenate([emb, jnp.flip(emb, axis=0)], axis=-1)  # (T_pad,B_pad,2H)
    emb_cat = emb_cat.astype(jnp.bfloat16)
    # Flatten to per-batch-tile, time-major 2D slabs: (nb, T_pad*Bt, 2H).
    emb_stream = emb_cat.reshape(T_pad, nb, Bt, H2)
    emb_stream = jnp.transpose(emb_stream, (1, 0, 2, 3)).reshape(nb, T_pad * Bt, H2)

    lens = jnp.pad(seq_lengths.astype(jnp.int32), (0, B_pad - B)).reshape(B_pad, 1)

    # ---- block-diagonal, gate-group-padded weight packing (f32) -----------------
    # column layout per gate g in {r, z, n}: [g*G : g*G+H] fwd, [g*G+H : g*G+2H] bwd
    wih = jnp.zeros((H2, 3 * G), f32)
    whh = jnp.zeros((G, 3 * G), f32)
    bih = jnp.zeros((1, 3 * G), f32)
    for g in range(3):
        c = g * G
        wih = wih.at[0:H, c:c + H].set(params["w_ih_f"][g * H:(g + 1) * H, :].T)
        wih = wih.at[H:H2, c + H:c + H2].set(params["w_ih_b"][g * H:(g + 1) * H, :].T)
        whh = whh.at[0:H, c:c + H].set(params["w_hh_f"][g * H:(g + 1) * H, :].T)
        whh = whh.at[H:H2, c + H:c + H2].set(params["w_hh_b"][g * H:(g + 1) * H, :].T)
        bf = params["b_ih_f"][g * H:(g + 1) * H]
        bb = params["b_ih_b"][g * H:(g + 1) * H]
        if g < 2:  # fold b_hh into r/z; the n-gate b_hh stays inside r * (...)
            bf = bf + params["b_hh_f"][g * H:(g + 1) * H]
            bb = bb + params["b_hh_b"][g * H:(g + 1) * H]
        bih = bih.at[0, c:c + H].set(bf)
        bih = bih.at[0, c + H:c + H2].set(bb)

    bn = jnp.zeros((1, G), f32)
    bn = bn.at[0, 0:H].set(params["b_hh_f"][2 * H:])
    bn = bn.at[0, H:H2].set(params["b_hh_b"][2 * H:])

    # FC consumes torch.cat([hidden[-1], hidden[-2]]) = [backward, forward]; the
    # state lane layout is [forward | backward], so swap the fc weight halves.
    fcw = jnp.zeros((G, O_pad), f32)
    fcw = fcw.at[0:H, :O].set(params["fc_w"][:, H:H2].T)     # forward lanes
    fcw = fcw.at[H:H2, :O].set(params["fc_w"][:, 0:H].T)     # backward lanes
    fcb = jnp.zeros((1, O_pad), f32).at[0, :O].set(params["fc_b"])

    kernel = _make_kernel(H, G, T_pad, tc, Bt)

    def const(shape):
        n = len(shape)
        # TODO(synk): single-buffer these constant-index blocks (pl.Buffered(1))
        # and cast fcw/fcb to bf16 to free VMEM on v7x.
        return pl.BlockSpec(shape, lambda b, i, _n=n: (0,) * _n)

    grid_spec = pltpu.PrefetchScalarGridSpec(
        num_scalar_prefetch=0,
        grid=(nb, nc),
        in_specs=[
            pl.BlockSpec((Bt, 1), lambda b, i: (b, 0)),                 # lens
            pl.BlockSpec((None, tc * Bt, H2), lambda b, i: (b, i, 0)),  # emb stream
            const((H2, 3 * G)), const((1, 3 * G)),                      # wih, bih
            const((G, 3 * G)), const((1, G)),                           # whh, bn
            const((G, O_pad)), const((1, O_pad)),                       # fc w, b
        ],
        out_specs=pl.BlockSpec((Bt, O_pad), lambda b, i: (b, 0)),
        scratch_shapes=[pltpu.VMEM((Bt, G), f32),            # carried hidden state
                        pltpu.VMEM((tc * Bt, 3 * G), f32)],  # per-chunk gx
    )

    db = 2  # Pallas default double-buffering per input/output block
    stream_bytes = tc * Bt * H2 * 2
    const_bytes = (Bt * 4 + H2 * 3 * G * 4 + 3 * G * 4 + G * 3 * G * 4 + G * 4
                   + G * O_pad * 4 + O_pad * 4 + Bt * O_pad * 4)
    scratch_bytes = Bt * G * 4 + tc * Bt * 3 * G * 4
    vmem_need = db * (stream_bytes + const_bytes) + scratch_bytes + (4 << 20)
    # 48 MiB cap leaves headroom on v7x's 64 MiB/TC; v5e/v6e have 128 MiB physical.
    vmem_limit = int(min(max(vmem_need, 16 << 20), 48 << 20))

    out_pad = pl.pallas_call(
        kernel,
        out_shape=jax.ShapeDtypeStruct((B_pad, O_pad), f32),
        grid_spec=grid_spec,
        compiler_params=pltpu.CompilerParams(
            dimension_semantics=("parallel", "arbitrary"),
            vmem_limit_bytes=vmem_limit),
    )(lens, emb_stream, wih, bih, whh, bn, fcw, fcb)

    return out_pad[:B, :O]


def make_params(key, vocab_size, hidden_size, output_size):
    H, O = hidden_size, output_size
    ks = jax.random.split(key, 12)
    gb = 1.0 / np.sqrt(H)
    fb = 1.0 / np.sqrt(2 * H)
    u = lambda k, shape, b: jax.random.uniform(k, shape, jnp.float32, -b, b)
    return {
        "emb_table": jax.random.normal(ks[0], (vocab_size, H), jnp.float32),
        # PyTorch GRU layout: (3H, H) weights, (3H,) biases, gate order (r, z, n)
        "w_ih_f": u(ks[1], (3 * H, H), gb), "w_hh_f": u(ks[2], (3 * H, H), gb),
        "b_ih_f": u(ks[3], (3 * H,), gb),   "b_hh_f": u(ks[4], (3 * H,), gb),
        "w_ih_b": u(ks[5], (3 * H, H), gb), "w_hh_b": u(ks[6], (3 * H, H), gb),
        "b_ih_b": u(ks[7], (3 * H,), gb),   "b_hh_b": u(ks[8], (3 * H,), gb),
        # PyTorch Linear layout: (O, 2H) weight, (O,) bias
        "fc_w": u(ks[9], (O, 2 * H), fb),   "fc_b": u(ks[10], (O,), fb),
    }


def reference_forward(token_ids, seq_lengths, params):
    """Pure-JAX f32 reference mirroring torch GRU(packed, bidirectional) + fc."""
    B, T = token_ids.shape
    H = params["emb_table"].shape[1]
    emb = jnp.transpose(jnp.take(params["emb_table"], token_ids, axis=0),
                        (1, 0, 2)).astype(jnp.float32)        # (T, B, H)
    lens = seq_lengths.astype(jnp.int32)

    def cell(x, h, w_ih, w_hh, b_ih, b_hh):
        gi = x @ w_ih.T + b_ih
        gh = h @ w_hh.T + b_hh
        r = jax.nn.sigmoid(gi[:, :H] + gh[:, :H])
        z = jax.nn.sigmoid(gi[:, H:2 * H] + gh[:, H:2 * H])
        n = jnp.tanh(gi[:, 2 * H:] + r * gh[:, 2 * H:])
        return (1.0 - z) * n + z * h

    hf = jnp.zeros((B, H), jnp.float32)
    for t in range(T):
        hn = cell(emb[t], hf, params["w_ih_f"], params["w_hh_f"],
                  params["b_ih_f"], params["b_hh_f"])
        hf = jnp.where((lens > t)[:, None], hn, hf)

    hb = jnp.zeros((B, H), jnp.float32)
    for t in reversed(range(T)):
        hn = cell(emb[t], hb, params["w_ih_b"], params["w_hh_b"],
                  params["b_ih_b"], params["b_hh_b"])
        hb = jnp.where((lens > t)[:, None], hn, hb)

    hidden_cat = jnp.concatenate([hb, hf], axis=1)   # [hidden[-1], hidden[-2]]
    return hidden_cat @ params["fc_w"].T + params["fc_b"]


if __name__ == "__main__":
    VOCAB, HIDDEN, OUTPUT = 30, 32, 6
    B, T = 4, 8

    key = jax.random.PRNGKey(0)
    k_params, k_tokens = jax.random.split(key)
    params = make_params(k_params, VOCAB, HIDDEN, OUTPUT)

    token_ids = jax.random.randint(k_tokens, (B, T), 0, VOCAB, dtype=jnp.int32)
    seq_lengths = jnp.array([8, 6, 4, 2], dtype=jnp.int32)   # sorted descending

    # small t_chunk to exercise the multi-chunk carried-state path
    out = rnn_classifier_forward(token_ids, seq_lengths, params, t_chunk=4)
    out = jax.block_until_ready(out)

    ref = reference_forward(token_ids, seq_lengths, params)
    assert out.shape == (B, OUTPUT)
    # only difference vs the f32 reference is bf16 rounding of the streamed
    # embeddings (all matmuls are f32 x f32 = f32) => comfortable tolerance
    assert np.allclose(np.asarray(out), np.asarray(ref), atol=5e-2, rtol=5e-2)

    print("KERNEL_OK")
</pallas_src>

<mosaic_0001>
module attributes {stable_mosaic.version = 11 : i64} {
  func.func @kernel(%arg0: i32, %arg1: i32, %arg2: memref<8x1xi32, #tpu.memory_space<vmem>>, %arg3: memref<1x32x64xbf16, #tpu.memory_space<vmem>>, %arg4: memref<64x384xf32, #tpu.memory_space<vmem>>, %arg5: memref<1x384xf32, #tpu.memory_space<vmem>>, %arg6: memref<128x384xf32, #tpu.memory_space<vmem>>, %arg7: memref<1x128xf32, #tpu.memory_space<vmem>>, %arg8: memref<128x128xf32, #tpu.memory_space<vmem>>, %arg9: memref<1x128xf32, #tpu.memory_space<vmem>>, %arg10: memref<8x128xf32, #tpu.memory_space<vmem>>, %arg11: memref<8x128xf32, #tpu.memory_space<vmem>>, %arg12: memref<32x384xf32, #tpu.memory_space<vmem>>) attributes {dimension_semantics = [#tpu.dimension_semantics<parallel>, #tpu.dimension_semantics<arbitrary>], iteration_bounds = array<i64: 1, 2>, scalar_prefetch = 0 : i64, scratch_operands = 2 : i64, tpu.core_type = #tpu.core_type<tc>, window_params = [{transform_indices = @transform_0, window_bounds = array<i64: 8, 1>}, {transform_indices = @transform_1, window_bounds = array<i64: 1, 32, 64>}, {pipeline_mode = #tpu.pipeline_mode<synchronous>, transform_indices = @transform_2, window_bounds = array<i64: 64, 384>}, {pipeline_mode = #tpu.pipeline_mode<synchronous>, transform_indices = @transform_3, window_bounds = array<i64: 1, 384>}, {pipeline_mode = #tpu.pipeline_mode<synchronous>, transform_indices = @transform_4, window_bounds = array<i64: 128, 384>}, {pipeline_mode = #tpu.pipeline_mode<synchronous>, transform_indices = @transform_5, window_bounds = array<i64: 1, 128>}, {pipeline_mode = #tpu.pipeline_mode<synchronous>, transform_indices = @transform_6, window_bounds = array<i64: 128, 128>}, {pipeline_mode = #tpu.pipeline_mode<synchronous>, transform_indices = @transform_7, window_bounds = array<i64: 1, 128>}, {transform_indices = @transform_8, window_bounds = array<i64: 8, 128>}]} {
    %c0_i32 = arith.constant 0 : i32
    %0 = arith.cmpi eq, %arg1, %c0_i32 : i32
    %1 = arith.extui %0 : i1 to i32
    %c0_i32_0 = arith.constant 0 : i32
    %2 = arith.cmpi ne, %1, %c0_i32_0 : i32
    scf.if %2 {
      %cst_61 = arith.constant 0.000000e+00 : f32
      %217 = vector.broadcast %cst_61 : f32 to vector<8x128xf32>
      %c0_62 = arith.constant 0 : index
      %c0_63 = arith.constant 0 : index
      %218 = vector.load %arg11[%c0_62, %c0_63] : memref<8x128xf32, #tpu.memory_space<vmem>>, vector<8x128xf32>
      tpu.vector_store %arg11[%c0_62, %c0_63], %217 {strides = array<i32>} : memref<8x128xf32, #tpu.memory_space<vmem>>, vector<8x128xf32>,
    } else {
    }
    %c0 = arith.constant 0 : index
    %c0_1 = arith.constant 0 : index
    %c0_2 = arith.constant 0 : index
    %3 = vector.load %arg3[%c0, %c0_1, %c0_2] : memref<1x32x64xbf16, #tpu.memory_space<vmem>>, vector<1x32x64xbf16>
    %4 = vector.shape_cast %3 : vector<1x32x64xbf16> to vector<32x64xbf16>
    %5 = arith.extf %4 : vector<32x64xbf16> to vector<32x64xf32>
    %c0_3 = arith.constant 0 : index
    %c0_4 = arith.constant 0 : index
    %6 = vector.load %arg4[%c0_3, %c0_4] : memref<64x384xf32, #tpu.memory_space<vmem>>, vector<64x384xf32>
    %cst = arith.constant dense<0.000000e+00> : vector<32x384xf32>
    %7 = tpu.matmul %5, %6, %cst {dimension_numbers = #tpu.dot_dimension_numbers<[1], [0], [0], [1], [0, 0, 1, 1], [], []>} : vector<32x64xf32>, vector<64x384xf32>, vector<32x384xf32> -> vector<32x384xf32>
    %c0_5 = arith.constant 0 : index
    %c0_6 = arith.constant 0 : index
    %8 = vector.load %arg5[%c0_5, %c0_6] : memref<1x384xf32, #tpu.memory_space<vmem>>, vector<1x384xf32>
    %9 = vector.broadcast %8 : vector<1x384xf32> to vector<32x384xf32>
    %10 = arith.addf %7, %9 : vector<32x384xf32>
    %c0_7 = arith.constant 0 : index
    %c0_8 = arith.constant 0 : index
    %11 = vector.load %arg12[%c0_7, %c0_8] : memref<32x384xf32, #tpu.memory_space<vmem>>, vector<32x384xf32>
    tpu.vector_store %arg12[%c0_7, %c0_8], %10 {strides = array<i32>} : memref<32x384xf32, #tpu.memory_space<vmem>>, vector<32x384xf32>,
    %c0_9 = arith.constant 0 : index
    %c0_10 = arith.constant 0 : index
    %12 = vector.load %arg2[%c0_9, %c0_10] : memref<8x1xi32, #tpu.memory_space<vmem>>, vector<8x1xi32>
    %c0_11 = arith.constant 0 : index
    %c0_12 = arith.constant 0 : index
    %13 = vector.load %arg7[%c0_11, %c0_12] : memref<1x128xf32, #tpu.memory_space<vmem>>, vector<1x128xf32>
    %14 = tpu.iota {dimensions = array<i32: 1>} : vector<1x128xi32>
    %c4_i32 = arith.constant 4 : i32
    %15 = arith.muli %arg1, %c4_i32 : i32
    %c0_13 = arith.constant 0 : index
    %c0_14 = arith.constant 0 : index
    %16 = vector.load %arg11[%c0_13, %c0_14] : memref<8x128xf32, #tpu.memory_space<vmem>>, vector<8x128xf32>
    %c1073741824_i32 = arith.constant 1073741824 : i32
    %c0_i32_15 = arith.constant 0 : i32
    %17 = arith.addi %15, %c0_i32_15 : i32
    %c8_i32 = arith.constant 8 : i32
    %18 = arith.muli %c0_i32_15, %c8_i32 : i32
    %19 = tpu.assume_multiple %18, 8 : i32
    %20 = arith.index_cast %19 : i32 to index
    %c0_16 = arith.constant 0 : index
    %21 = vector.load %arg12[%20, %c0_16] : memref<32x384xf32, #tpu.memory_space<vmem>>, vector<8x384xf32>
    %c0_17 = arith.constant 0 : index
    %c0_18 = arith.constant 0 : index
    %22 = vector.load %arg6[%c0_17, %c0_18] : memref<128x384xf32, #tpu.memory_space<vmem>>, vector<128x384xf32>
    %cst_19 = arith.constant dense<0.000000e+00> : vector<8x384xf32>
    %23 = tpu.matmul %16, %22, %cst_19 {dimension_numbers = #tpu.dot_dimension_numbers<[1], [0], [0], [1], [0, 0, 1, 1], [], []>} : vector<8x128xf32>, vector<128x384xf32>, vector<8x384xf32> -> vector<8x384xf32>
    %24 = vector.extract_strided_slice %21 {offsets = [0, 0], sizes = [8, 128], strides = [1, 1]} : vector<8x384xf32> to vector<8x128xf32>
    %25 = vector.extract_strided_slice %23 {offsets = [0, 0], sizes = [8, 128], strides = [1, 1]} : vector<8x384xf32> to vector<8x128xf32>
    %26 = arith.addf %24, %25 : vector<8x128xf32>
    %27 = arith.negf %26 : vector<8x128xf32>
    %28 = math.exp %27 : vector<8x128xf32>
    %cst_20 = arith.constant 1.000000e+00 : f32
    %29 = vector.broadcast %cst_20 : f32 to vector<8x128xf32>
    %30 = arith.addf %29, %28 : vector<8x128xf32>
    %31 = arith.divf %29, %30 : vector<8x128xf32>
    %32 = vector.extract_strided_slice %21 {offsets = [0, 128], sizes = [8, 128], strides = [1, 1]} : vector<8x384xf32> to vector<8x128xf32>
    %33 = vector.extract_strided_slice %23 {offsets = [0, 128], sizes = [8, 128], strides = [1, 1]} : vector<8x384xf32> to vector<8x128xf32>
    %34 = arith.addf %32, %33 : vector<8x128xf32>
    %35 = arith.negf %34 : vector<8x128xf32>
    %36 = math.exp %35 : vector<8x128xf32>
    %cst_21 = arith.constant 1.000000e+00 : f32
    %37 = vector.broadcast %cst_21 : f32 to vector<8x128xf32>
    %38 = arith.addf %37, %36 : vector<8x128xf32>
    %39 = arith.divf %37, %38 : vector<8x128xf32>
    %40 = vector.extract_strided_slice %21 {offsets = [0, 256], sizes = [8, 128], strides = [1, 1]} : vector<8x384xf32> to vector<8x128xf32>
    %41 = vector.extract_strided_slice %23 {offsets = [0, 256], sizes = [8, 128], strides = [1, 1]} : vector<8x384xf32> to vector<8x128xf32>
    %42 = vector.broadcast %13 : vector<1x128xf32> to vector<8x128xf32>
    %43 = arith.addf %41, %42 : vector<8x128xf32>
    %44 = arith.mulf %31, %43 : vector<8x128xf32>
    %45 = arith.addf %40, %44 : vector<8x128xf32>
    %46 = math.tanh %45 : vector<8x128xf32>
    %cst_22 = arith.constant 1.000000e+00 : f32
    %47 = vector.broadcast %cst_22 : f32 to vector<8x128xf32>
    %48 = arith.subf %47, %39 : vector<8x128xf32>
    %49 = arith.mulf %48, %46 : vector<8x128xf32>
    %50 = arith.mulf %39, %16 : vector<8x128xf32>
    %51 = arith.addf %49, %50 : vector<8x128xf32>
    %c32_i32 = arith.constant 32 : i32
    %52 = vector.broadcast %c32_i32 : i32 to vector<1x128xi32>
    %53 = arith.cmpi slt, %14, %52 : vector<1x128xi32>
    %c64_i32 = arith.constant 64 : i32
    %54 = vector.broadcast %c64_i32 : i32 to vector<1x128xi32>
    %55 = arith.cmpi slt, %14, %54 : vector<1x128xi32>
    %c7_i32 = arith.constant 7 : i32
    %56 = arith.subi %c7_i32, %17 : i32
    %57 = vector.broadcast %56 : i32 to vector<1x128xi32>
    %58 = vector.broadcast %c1073741824_i32 : i32 to vector<1x128xi32>
    %59 = arith.select %55, %57, %58 : vector<1x128xi1>, vector<1x128xi32>
    %60 = vector.broadcast %17 : i32 to vector<1x128xi32>
    %61 = arith.select %53, %60, %59 : vector<1x128xi1>, vector<1x128xi32>
    %62 = vector.broadcast %12 : vector<8x1xi32> to vector<8x128xi32>
    %63 = vector.broadcast %61 : vector<1x128xi32> to vector<8x128xi32>
    %64 = arith.cmpi sgt, %62, %63 : vector<8x128xi32>
    %65 = arith.select %64, %51, %16 : vector<8x128xi1>, vector<8x128xf32>
    %c1_i32 = arith.constant 1 : i32
    %66 = arith.addi %15, %c1_i32 : i32
    %c8_i32_23 = arith.constant 8 : i32
    %67 = arith.muli %c1_i32, %c8_i32_23 : i32
    %68 = tpu.assume_multiple %67, 8 : i32
    %69 = arith.index_cast %68 : i32 to index
    %c0_24 = arith.constant 0 : index
    %70 = vector.load %arg12[%69, %c0_24] : memref<32x384xf32, #tpu.memory_space<vmem>>, vector<8x384xf32>
    %c0_25 = arith.constant 0 : index
    %c0_26 = arith.constant 0 : index
    %71 = vector.load %arg6[%c0_25, %c0_26] : memref<128x384xf32, #tpu.memory_space<vmem>>, vector<128x384xf32>
    %cst_27 = arith.constant dense<0.000000e+00> : vector<8x384xf32>
    %72 = tpu.matmul %65, %71, %cst_27 {dimension_numbers = #tpu.dot_dimension_numbers<[1], [0], [0], [1], [0, 0, 1, 1], [], []>} : vector<8x128xf32>, vector<128x384xf32>, vector<8x384xf32> -> vector<8x384xf32>
    %73 = vector.extract_strided_slice %70 {offsets = [0, 0], sizes = [8, 128], strides = [1, 1]} : vector<8x384xf32> to vector<8x128xf32>
    %74 = vector.extract_strided_slice %72 {offsets = [0, 0], sizes = [8, 128], strides = [1, 1]} : vector<8x384xf32> to vector<8x128xf32>
    %75 = arith.addf %73, %74 : vector<8x128xf32>
    %76 = arith.negf %75 : vector<8x128xf32>
    %77 = math.exp %76 : vector<8x128xf32>
    %cst_28 = arith.constant 1.000000e+00 : f32
    %78 = vector.broadcast %cst_28 : f32 to vector<8x128xf32>
    %79 = arith.addf %78, %77 : vector<8x128xf32>
    %80 = arith.divf %78, %79 : vector<8x128xf32>
    %81 = vector.extract_strided_slice %70 {offsets = [0, 128], sizes = [8, 128], strides = [1, 1]} : vector<8x384xf32> to vector<8x128xf32>
    %82 = vector.extract_strided_slice %72 {offsets = [0, 128], sizes = [8, 128], strides = [1, 1]} : vector<8x384xf32> to vector<8x128xf32>
    %83 = arith.addf %81, %82 : vector<8x128xf32>
    %84 = arith.negf %83 : vector<8x128xf32>
    %85 = math.exp %84 : vector<8x128xf32>
    %cst_29 = arith.constant 1.000000e+00 : f32
    %86 = vector.broadcast %cst_29 : f32 to vector<8x128xf32>
    %87 = arith.addf %86, %85 : vector<8x128xf32>
    %88 = arith.divf %86, %87 : vector<8x128xf32>
    %89 = vector.extract_strided_slice %70 {offsets = [0, 256], sizes = [8, 128], strides = [1, 1]} : vector<8x384xf32> to vector<8x128xf32>
    %90 = vector.extract_strided_slice %72 {offsets = [0, 256], sizes = [8, 128], strides = [1, 1]} : vector<8x384xf32> to vector<8x128xf32>
    %91 = vector.broadcast %13 : vector<1x128xf32> to vector<8x128xf32>
    %92 = arith.addf %90, %91 : vector<8x128xf32>
    %93 = arith.mulf %80, %92 : vector<8x128xf32>
    %94 = arith.addf %89, %93 : vector<8x128xf32>
    %95 = math.tanh %94 : vector<8x128xf32>
    %cst_30 = arith.constant 1.000000e+00 : f32
    %96 = vector.broadcast %cst_30 : f32 to vector<8x128xf32>
    %97 = arith.subf %96, %88 : vector<8x128xf32>
    %98 = arith.mulf %97, %95 : vector<8x128xf32>
    %99 = arith.mulf %88, %65 : vector<8x128xf32>
    %100 = arith.addf %98, %99 : vector<8x128xf32>
    %c32_i32_31 = arith.constant 32 : i32
    %101 = vector.broadcast %c32_i32_31 : i32 to vector<1x128xi32>
    %102 = arith.cmpi slt, %14, %101 : vector<1x128xi32>
    %c64_i32_32 = arith.constant 64 : i32
    %103 = vector.broadcast %c64_i32_32 : i32 to vector<1x128xi32>
    %104 = arith.cmpi slt, %14, %103 : vector<1x128xi32>
    %c7_i32_33 = arith.constant 7 : i32
    %105 = arith.subi %c7_i32_33, %66 : i32
    %106 = vector.broadcast %105 : i32 to vector<1x128xi32>
    %107 = vector.broadcast %c1073741824_i32 : i32 to vector<1x128xi32>
    %108 = arith.select %104, %106, %107 : vector<1x128xi1>, vector<1x128xi32>
    %109 = vector.broadcast %66 : i32 to vector<1x128xi32>
    %110 = arith.select %102, %109, %108 : vector<1x128xi1>, vector<1x128xi32>
    %111 = vector.broadcast %12 : vector<8x1xi32> to vector<8x128xi32>
    %112 = vector.broadcast %110 : vector<1x128xi32> to vector<8x128xi32>
    %113 = arith.cmpi sgt, %111, %112 : vector<8x128xi32>
    %114 = arith.select %113, %100, %65 : vector<8x128xi1>, vector<8x128xf32>
    %c2_i32 = arith.constant 2 : i32
    %115 = arith.addi %15, %c2_i32 : i32
    %c8_i32_34 = arith.constant 8 : i32
    %116 = arith.muli %c2_i32, %c8_i32_34 : i32
    %117 = tpu.assume_multiple %116, 8 : i32
    %118 = arith.index_cast %117 : i32 to index
    %c0_35 = arith.constant 0 : index
    %119 = vector.load %arg12[%118, %c0_35] : memref<32x384xf32, #tpu.memory_space<vmem>>, vector<8x384xf32>
    %c0_36 = arith.constant 0 : index
    %c0_37 = arith.constant 0 : index
    %120 = vector.load %arg6[%c0_36, %c0_37] : memref<128x384xf32, #tpu.memory_space<vmem>>, vector<128x384xf32>
    %cst_38 = arith.constant dense<0.000000e+00> : vector<8x384xf32>
    %121 = tpu.matmul %114, %120, %cst_38 {dimension_numbers = #tpu.dot_dimension_numbers<[1], [0], [0], [1], [0, 0, 1, 1], [], []>} : vector<8x128xf32>, vector<128x384xf32>, vector<8x384xf32> -> vector<8x384xf32>
    %122 = vector.extract_strided_slice %119 {offsets = [0, 0], sizes = [8, 128], strides = [1, 1]} : vector<8x384xf32> to vector<8x128xf32>
    %123 = vector.extract_strided_slice %121 {offsets = [0, 0], sizes = [8, 128], strides = [1, 1]} : vector<8x384xf32> to vector<8x128xf32>
    %124 = arith.addf %122, %123 : vector<8x128xf32>
    %125 = arith.negf %124 : vector<8x128xf32>
    %126 = math.exp %125 : vector<8x128xf32>
    %cst_39 = arith.constant 1.000000e+00 : f32
    %127 = vector.broadcast %cst_39 : f32 to vector<8x128xf32>
    %128 = arith.addf %127, %126 : vector<8x128xf32>
    %129 = arith.divf %127, %128 : vector<8x128xf32>
    %130 = vector.extract_strided_slice %119 {offsets = [0, 128], sizes = [8, 128], strides = [1, 1]} : vector<8x384xf32> to vector<8x128xf32>
    %131 = vector.extract_strided_slice %121 {offsets = [0, 128], sizes = [8, 128], strides = [1, 1]} : vector<8x384xf32> to vector<8x128xf32>
    %132 = arith.addf %130, %131 : vector<8x128xf32>
    %133 = arith.negf %132 : vector<8x128xf32>
    %134 = math.exp %133 : vector<8x128xf32>
    %cst_40 = arith.constant 1.000000e+00 : f32
    %135 = vector.broadcast %cst_40 : f32 to vector<8x128xf32>
    %136 = arith.addf %135, %134 : vector<8x128xf32>
    %137 = arith.divf %135, %136 : vector<8x128xf32>
    %138 = vector.extract_strided_slice %119 {offsets = [0, 256], sizes = [8, 128], strides = [1, 1]} : vector<8x384xf32> to vector<8x128xf32>
    %139 = vector.extract_strided_slice %121 {offsets = [0, 256], sizes = [8, 128], strides = [1, 1]} : vector<8x384xf32> to vector<8x128xf32>
    %140 = vector.broadcast %13 : vector<1x128xf32> to vector<8x128xf32>
    %141 = arith.addf %139, %140 : vector<8x128xf32>
    %142 = arith.mulf %129, %141 : vector<8x128xf32>
    %143 = arith.addf %138, %142 : vector<8x128xf32>
    %144 = math.tanh %143 : vector<8x128xf32>
    %cst_41 = arith.constant 1.000000e+00 : f32
    %145 = vector.broadcast %cst_41 : f32 to vector<8x128xf32>
    %146 = arith.subf %145, %137 : vector<8x128xf32>
    %147 = arith.mulf %146, %144 : vector<8x128xf32>
    %148 = arith.mulf %137, %114 : vector<8x128xf32>
    %149 = arith.addf %147, %148 : vector<8x128xf32>
    %c32_i32_42 = arith.constant 32 : i32
    %150 = vector.broadcast %c32_i32_42 : i32 to vector<1x128xi32>
    %151 = arith.cmpi slt, %14, %150 : vector<1x128xi32>
    %c64_i32_43 = arith.constant 64 : i32
    %152 = vector.broadcast %c64_i32_43 : i32 to vector<1x128xi32>
    %153 = arith.cmpi slt, %14, %152 : vector<1x128xi32>
    %c7_i32_44 = arith.constant 7 : i32
    %154 = arith.subi %c7_i32_44, %115 : i32
    %155 = vector.broadcast %154 : i32 to vector<1x128xi32>
    %156 = vector.broadcast %c1073741824_i32 : i32 to vector<1x128xi32>
    %157 = arith.select %153, %155, %156 : vector<1x128xi1>, vector<1x128xi32>
    %158 = vector.broadcast %115 : i32 to vector<1x128xi32>
    %159 = arith.select %151, %158, %157 : vector<1x128xi1>, vector<1x128xi32>
    %160 = vector.broadcast %12 : vector<8x1xi32> to vector<8x128xi32>
    %161 = vector.broadcast %159 : vector<1x128xi32> to vector<8x128xi32>
    %162 = arith.cmpi sgt, %160, %161 : vector<8x128xi32>
    %163 = arith.select %162, %149, %114 : vector<8x128xi1>, vector<8x128xf32>
    %c3_i32 = arith.constant 3 : i32
    %164 = arith.addi %15, %c3_i32 : i32
    %c8_i32_45 = arith.constant 8 : i32
    %165 = arith.muli %c3_i32, %c8_i32_45 : i32
    %166 = tpu.assume_multiple %165, 8 : i32
    %167 = arith.index_cast %166 : i32 to index
    %c0_46 = arith.constant 0 : index
    %168 = vector.load %arg12[%167, %c0_46] : memref<32x384xf32, #tpu.memory_space<vmem>>, vector<8x384xf32>
    %c0_47 = arith.constant 0 : index
    %c0_48 = arith.constant 0 : index
    %169 = vector.load %arg6[%c0_47, %c0_48] : memref<128x384xf32, #tpu.memory_space<vmem>>, vector<128x384xf32>
    %cst_49 = arith.constant dense<0.000000e+00> : vector<8x384xf32>
    %170 = tpu.matmul %163, %169, %cst_49 {dimension_numbers = #tpu.dot_dimension_numbers<[1], [0], [0], [1], [0, 0, 1, 1], [], []>} : vector<8x128xf32>, vector<128x384xf32>, vector<8x384xf32> -> vector<8x384xf32>
    %171 = vector.extract_strided_slice %168 {offsets = [0, 0], sizes = [8, 128], strides = [1, 1]} : vector<8x384xf32> to vector<8x128xf32>
    %172 = vector.extract_strided_slice %170 {offsets = [0, 0], sizes = [8, 128], strides = [1, 1]} : vector<8x384xf32> to vector<8x128xf32>
    %173 = arith.addf %171, %172 : vector<8x128xf32>
    %174 = arith.negf %173 : vector<8x128xf32>
    %175 = math.exp %174 : vector<8x128xf32>
    %cst_50 = arith.constant 1.000000e+00 : f32
    %176 = vector.broadcast %cst_50 : f32 to vector<8x128xf32>
    %177 = arith.addf %176, %175 : vector<8x128xf32>
    %178 = arith.divf %176, %177 : vector<8x128xf32>
    %179 = vector.extract_strided_slice %168 {offsets = [0, 128], sizes = [8, 128], strides = [1, 1]} : vector<8x384xf32> to vector<8x128xf32>
    %180 = vector.extract_strided_slice %170 {offsets = [0, 128], sizes = [8, 128], strides = [1, 1]} : vector<8x384xf32> to vector<8x128xf32>
    %181 = arith.addf %179, %180 : vector<8x128xf32>
    %182 = arith.negf %181 : vector<8x128xf32>
    %183 = math.exp %182 : vector<8x128xf32>
    %cst_51 = arith.constant 1.000000e+00 : f32
    %184 = vector.broadcast %cst_51 : f32 to vector<8x128xf32>
    %185 = arith.addf %184, %183 : vector<8x128xf32>
    %186 = arith.divf %184, %185 : vector<8x128xf32>
    %187 = vector.extract_strided_slice %168 {offsets = [0, 256], sizes = [8, 128], strides = [1, 1]} : vector<8x384xf32> to vector<8x128xf32>
    %188 = vector.extract_strided_slice %170 {offsets = [0, 256], sizes = [8, 128], strides = [1, 1]} : vector<8x384xf32> to vector<8x128xf32>
    %189 = vector.broadcast %13 : vector<1x128xf32> to vector<8x128xf32>
    %190 = arith.addf %188, %189 : vector<8x128xf32>
    %191 = arith.mulf %178, %190 : vector<8x128xf32>
    %192 = arith.addf %187, %191 : vector<8x128xf32>
    %193 = math.tanh %192 : vector<8x128xf32>
    %cst_52 = arith.constant 1.000000e+00 : f32
    %194 = vector.broadcast %cst_52 : f32 to vector<8x128xf32>
    %195 = arith.subf %194, %186 : vector<8x128xf32>
    %196 = arith.mulf %195, %193 : vector<8x128xf32>
    %197 = arith.mulf %186, %163 : vector<8x128xf32>
    %198 = arith.addf %196, %197 : vector<8x128xf32>
    %c32_i32_53 = arith.constant 32 : i32
    %199 = vector.broadcast %c32_i32_53 : i32 to vector<1x128xi32>
    %200 = arith.cmpi slt, %14, %199 : vector<1x128xi32>
    %c64_i32_54 = arith.constant 64 : i32
    %201 = vector.broadcast %c64_i32_54 : i32 to vector<1x128xi32>
    %202 = arith.cmpi slt, %14, %201 : vector<1x128xi32>
    %c7_i32_55 = arith.constant 7 : i32
    %203 = arith.subi %c7_i32_55, %164 : i32
    %204 = vector.broadcast %203 : i32 to vector<1x128xi32>
    %205 = vector.broadcast %c1073741824_i32 : i32 to vector<1x128xi32>
    %206 = arith.select %202, %204, %205 : vector<1x128xi1>, vector<1x128xi32>
    %207 = vector.broadcast %164 : i32 to vector<1x128xi32>
    %208 = arith.select %200, %207, %206 : vector<1x128xi1>, vector<1x128xi32>
    %209 = vector.broadcast %12 : vector<8x1xi32> to vector<8x128xi32>
    %210 = vector.broadcast %208 : vector<1x128xi32> to vector<8x128xi32>
    %211 = arith.cmpi sgt, %209, %210 : vector<8x128xi32>
    %212 = arith.select %211, %198, %163 : vector<8x128xi1>, vector<8x128xf32>
    %c4_i32_56 = arith.constant 4 : i32
    %c0_57 = arith.constant 0 : index
    %c0_58 = arith.constant 0 : index
    %213 = vector.load %arg11[%c0_57, %c0_58] : memref<8x128xf32, #tpu.memory_space<vmem>>, vector<8x128xf32>
    tpu.vector_store %arg11[%c0_57, %c0_58], %212 {strides = array<i32>} : memref<8x128xf32, #tpu.memory_space<vmem>>, vector<8x128xf32>,
    %c1_i32_59 = arith.constant 1 : i32
    %214 = arith.cmpi eq, %arg1, %c1_i32_59 : i32
    %215 = arith.extui %214 : i1 to i32
    %c0_i32_60 = arith.constant 0 : i32
    %216 = arith.cmpi ne, %215, %c0_i32_60 : i32
    scf.if %216 {
      %c0_61 = arith.constant 0 : index
      %c0_62 = arith.constant 0 : index
      %217 = vector.load %arg8[%c0_61, %c0_62] : memref<128x128xf32, #tpu.memory_space<vmem>>, vector<128x128xf32>
      %cst_63 = arith.constant dense<0.000000e+00> : vector<8x128xf32>
      %218 = tpu.matmul %212, %217, %cst_63 {dimension_numbers = #tpu.dot_dimension_numbers<[1], [0], [0], [1], [0, 0, 1, 1], [], []>} : vector<8x128xf32>, vector<128x128xf32>, vector<8x128xf32> -> vector<8x128xf32>
      %c0_64 = arith.constant 0 : index
      %c0_65 = arith.constant 0 : index
      %219 = vector.load %arg9[%c0_64, %c0_65] : memref<1x128xf32, #tpu.memory_space<vmem>>, vector<1x128xf32>
      %220 = vector.broadcast %219 : vector<1x128xf32> to vector<8x128xf32>
      %221 = arith.addf %218, %220 : vector<8x128xf32>
      %c0_66 = arith.constant 0 : index
      %c0_67 = arith.constant 0 : index
      %222 = vector.load %arg10[%c0_66, %c0_67] : memref<8x128xf32, #tpu.memory_space<vmem>>, vector<8x128xf32>
      tpu.vector_store %arg10[%c0_66, %c0_67], %221 {strides = array<i32>} : memref<8x128xf32, #tpu.memory_space<vmem>>, vector<8x128xf32>,
    } else {
    }
    return
  }
  func.func @transform_0(%arg0: i32, %arg1: i32) -> (i32, i32) {
    %c0_i32 = arith.constant 0 : i32
    %c0_i32_0 = arith.constant 0 : i32
    return %arg0, %c0_i32 : i32, i32
  }
  func.func @transform_1(%arg0: i32, %arg1: i32) -> (i32, i32, i32) {
    %c0_i32 = arith.constant 0 : i32
    %c0_i32_0 = arith.constant 0 : i32
    return %arg0, %arg1, %c0_i32 : i32, i32, i32
  }
  func.func @transform_2(%arg0: i32, %arg1: i32) -> (i32, i32) {
    %c0_i32 = arith.constant 0 : i32
    %c0_i32_0 = arith.constant 0 : i32
    %c0_i32_1 = arith.constant 0 : i32
    return %c0_i32, %c0_i32_0 : i32, i32
  }
  func.func @transform_3(%arg0: i32, %arg1: i32) -> (i32, i32) {
    %c0_i32 = arith.constant 0 : i32
    %c0_i32_0 = arith.constant 0 : i32
    %c0_i32_1 = arith.constant 0 : i32
    return %c0_i32, %c0_i32_0 : i32, i32
  }
  func.func @transform_4(%arg0: i32, %arg1: i32) -> (i32, i32) {
    %c0_i32 = arith.constant 0 : i32
    %c0_i32_0 = arith.constant 0 : i32
    %c0_i32_1 = arith.constant 0 : i32
    return %c0_i32, %c0_i32_0 : i32, i32
  }
  func.func @transform_5(%arg0: i32, %arg1: i32) -> (i32, i32) {
    %c0_i32 = arith.constant 0 : i32
    %c0_i32_0 = arith.constant 0 : i32
    %c0_i32_1 = arith.constant 0 : i32
    return %c0_i32, %c0_i32_0 : i32, i32
  }
  func.func @transform_6(%arg0: i32, %arg1: i32) -> (i32, i32) {
    %c0_i32 = arith.constant 0 : i32
    %c0_i32_0 = arith.constant 0 : i32
    %c0_i32_1 = arith.constant 0 : i32
    return %c0_i32, %c0_i32_0 : i32, i32
  }
  func.func @transform_7(%arg0: i32, %arg1: i32) -> (i32, i32) {
    %c0_i32 = arith.constant 0 : i32
    %c0_i32_0 = arith.constant 0 : i32
    %c0_i32_1 = arith.constant 0 : i32
    return %c0_i32, %c0_i32_0 : i32, i32
  }
  func.func @transform_8(%arg0: i32, %arg1: i32) -> (i32, i32) {
    %c0_i32 = arith.constant 0 : i32
    %c0_i32_0 = arith.constant 0 : i32
    return %arg0, %c0_i32 : i32, i32
  }
}

</mosaic_0001>

<llo_original>
// kernel: tpu_custom_call.1
$region0: #{tpu_custom_call.1}
  #allocation0 [shape = 'u32[]', space=smem, size = 0x4, offset = 0x4, fixed_abs, tag = 'smem constant byte address 0x4 - core index']
  #allocation1 [shape = 'u32[144,128]{1,0:T(1,128)}', space=vmem, size = 0x12000, scoped, tag = 'internal scratch']
  #allocation2 [shape = 'f32[8,128]{1,0:T(8,128)}', space=vmem, size = 0x1000, scoped, tag = 'scratch operand']
  #allocation3 [shape = 'f32[32,384]{1,0:T(8,128)}', space=vmem, size = 0xc000, scoped, tag = 'scratch operand']
  %s0 = inlined_call_operand.vmem [shape: s32[8,1], index: 0, kind: input, shape index: {}]
  %s1 = inlined_call_operand.hbm [shape: bf16[1,64,64], index: 1, kind: input, shape index: {}]
  %s2 = inlined_call_operand.hbm [shape: f32[64,384], index: 2, kind: input, shape index: {}]
  %s3 = inlined_call_operand.vmem [shape: f32[1,384], index: 3, kind: input, shape index: {}]
  %s4 = inlined_call_operand.hbm [shape: f32[128,384], index: 4, kind: input, shape index: {}]
  %s5 = inlined_call_operand.vmem [shape: f32[1,128], index: 5, kind: input, shape index: {}]
  %s6 = inlined_call_operand.hbm [shape: f32[128,128], index: 6, kind: input, shape index: {}]
  %s7 = inlined_call_operand.vmem [shape: f32[1,128], index: 7, kind: input, shape index: {}]
  %s8 = inlined_call_operand.hbm [shape: f32[8,128], index: 8, kind: output, shape index: {}]
  %s9 = sld [smem:[#allocation0]]
  $region89: #{tpu_custom_call.1} parent=0
    _
  %s11 = ssub.s32 1, %s9
  %s12 = scalar_select 0, %s11, %s9
  $region1: #{tpu_custom_call.1} parent=0
    #allocation4 [shape = 'u8[16384]{0}', space=vmem, size = 0x4000, scoped, tag = 'input window, operand 1']
    #allocation5 [shape = 's32[2]{0}', space=sflag, size = 0x8, scoped, tag = 'scoped memory for tpu_custom_call.1']
    #allocation6 [shape = 's32[2]{0}', space=sflag, size = 0x8, scoped, tag = 'scoped memory for tpu_custom_call.1']
    #allocation7 [shape = 'u8[98304]{0}', space=vmem, size = 0x18000, scoped, tag = 'input window, operand 2, single buffered']
    #allocation8 [shape = 's32[1]{0}', space=sflag, size = 0x4, scoped, tag = 'scoped memory for tpu_custom_call.1']
    #allocation9 [shape = 'u8[196608]{0}', space=vmem, size = 0x30000, scoped, tag = 'input window, operand 4, single buffered']
    #allocation10 [shape = 'u8[65536]{0}', space=vmem, size = 0x10000, scoped, tag = 'input window, operand 6, single buffered']
    #allocation11 [shape = 's32[1]{0}', space=sflag, size = 0x4, scoped, tag = 'scoped memory for tpu_custom_call.1']
    #allocation12 [shape = 'u8[4096]{0}', space=vmem, size = 0x1000, scoped, tag = 'output window, operand 0, single buffered']
    %13 = vsyncpa [#allocation5], 0
    %s14 = scalar_lea.sflag [#allocation5], 1
    %15 = vsyncpa %s14, 0
    %16 = vsyncpa [#allocation8], 0
    %17 = vsyncpa [#allocation11], 0
    %18 = vsyncpa [#allocation6], 0
    loop: start=0, step=1, limit=4
    $region2: #{tpu_custom_call.1} parent=1 // loop_pre_header
      _
    $region3: #{tpu_custom_call.1} parent=1 // loop_header
      %s20 = sphi 0, %s24
      %p21 = scmp.ge.s32.totalorder %s20, 4
      %s27 = sphi 0, %s39
      %s28 = sphi 0, %s35
      %s29 = sphi 0, %s27
      %s30 = sphi 0, %s28
      %s31 = sphi 0, %s29
      %s32 = sphi 0, %s30
      %s42 = sphi 0, %s44
      %s45 = sphi 0, %s42
      %s46 = sphi 0, %s45
      %s62 = sphi 0, %s46
      %s70 = sphi 0, %s72
      %s73 = sphi 0, %s70
      %s74 = sphi 0, %s73
      %s90 = sphi 0, %s74
      %s94 = sphi 0, %s94
      %s96 = sphi 0, %s94
      %s97 = sphi 0, %s96
      %s111 = sphi 0, %s97
      %s115 = sphi 0, %s115
      %s117 = sphi 0, %s115
      %s118 = sphi 0, %s117
      %s132 = sphi 0, %s118
      %s136 = sphi 0, %s136
      %s138 = sphi 0, %s136
      %s139 = sphi 0, %s138
      %s153 = sphi 0, %s139
      %s157 = sphi 0, %s157
      %s159 = sphi 0, %s157
      %s160 = sphi 0, %s159
      %s174 = sphi 0, %s160
      %s178 = sphi 0, %s178
      %s180 = sphi 0, %s178
      %s181 = sphi 0, %s180
      %s195 = sphi 0, %s181
      %s199 = sphi 0, %s199
      %s201 = sphi 0, %s199
      %s202 = sphi 0, %s201
      %s216 = sphi 0, %s202
      %s222 = sphi 0, %s224
      %s225 = sphi 0, %s222
      %s226 = sphi 0, %s225
      %s242 = sphi 0, %s226
    $region4: #{tpu_custom_call.1} parent=1 // loop_header_branch
      %23 = sbr.rel (%p21) target = $region8
    $region5: #{tpu_custom_call.1} parent=1 // loop_body
      %s25 = ssub.s32 %s20, 1
      %s26 = ssub.s32 %s20, 2
      %s33 = sadd.s32 1, %s28
      %p34 = scmp.ge.s32.totalorder %s33, 2
      %s35 = scalar_select %p34, 0, %s33
      %s36 = sadd.s32 1, %s27
      %s37 = scalar_select %p34, %s36, %s27
      %p38 = scmp.ge.s32.totalorder %s37, 1
      %s39 = scalar_select %p38, 0, %s37
      %s40 = ssub.s32 %s27, %s39
      %p41 = scmp.eq.s32.totalorder %s40, 0
      %s43 = sadd.s32 %s42, 1
      %s44 = scalar_select %p41, %s42, %s43
      %p47 = pneg %p41
      %p48 = scmp.eq.s32.totalorder %s20, 1
      %p49 = por %p47, %p48
      %p50 = scmp.ne.s32.totalorder %s42, %s45
      %p51 = scmp.eq.s32.totalorder %s20, 0
      %p52 = por %p50, %p51
      %p53 = scmp.ne.s32.totalorder %s42, %s45
      %p54 = scmp.eq.s32.totalorder %s25, 1
      %p55 = por %p53, %p54
      %p56 = scmp.ne.s32.totalorder %s45, %s46
      %p57 = scmp.eq.s32.totalorder %s25, 0
      %p58 = por %p56, %p57
      %p59 = scmp.ne.s32.totalorder %s45, %s46
      %p60 = scmp.eq.s32.totalorder %s26, 1
      %p61 = por %p59, %p60
      %p63 = scmp.ne.s32.totalorder %s46, %s62
      %p64 = scmp.eq.s32.totalorder %s26, 0
      %p65 = por %p63, %p64
      %s66 = ssub.s32 %s27, %s39
      %s67 = ssub.s32 %s28, %s35
      %s68 = sor.u32 %s66, %s67
      %p69 = scmp.eq.s32.totalorder %s68, 0
      %s71 = sadd.s32 %s70, 1
      %s72 = scalar_select %p69, %s70, %s71
      %p75 = pneg %p69
      %p76 = scmp.eq.s32.totalorder %s20, 1
      %p77 = por %p75, %p76
      %p78 = scmp.ne.s32.totalorder %s70, %s73
      %p79 = scmp.eq.s32.totalorder %s20, 0
      %p80 = por %p78, %p79
      %p81 = scmp.ne.s32.totalorder %s70, %s73
      %p82 = scmp.eq.s32.totalorder %s25, 1
      %p83 = por %p81, %p82
      %p84 = scmp.ne.s32.totalorder %s73, %s74
      %p85 = scmp.eq.s32.totalorder %s25, 0
      %p86 = por %p84, %p85
      %p87 = scmp.ne.s32.totalorder %s73, %s74
      %p88 = scmp.eq.s32.totalorder %s26, 1
      %p89 = por %p87, %p88
      %p91 = scmp.ne.s32.totalorder %s74, %s90
      %p92 = scmp.eq.s32.totalorder %s26, 0
      %p93 = por %p91, %p92
      %s95 = sadd.s32 %s94, 1
      %p98 = scmp.eq.s32.totalorder %s20, 1
      %p99 = scmp.ne.s32.totalorder %s94, %s96
      %p100 = scmp.eq.s32.totalorder %s20, 0
      %p101 = por %p99, %p100
      %p102 = scmp.ne.s32.totalorder %s94, %s96
      %p103 = scmp.eq.s32.totalorder %s25, 1
      %p104 = por %p102, %p103
      %p105 = scmp.ne.s32.totalorder %s96, %s97
      %p106 = scmp.eq.s32.totalorder %s25, 0
      %p107 = por %p105, %p106
      %p108 = scmp.ne.s32.totalorder %s96, %s97
      %p109 = scmp.eq.s32.totalorder %s26, 1
      %p110 = por %p108, %p109
      %p112 = scmp.ne.s32.totalorder %s97, %s111
      %p113 = scmp.eq.s32.totalorder %s26, 0
      %p114 = por %p112, %p113
      %s116 = sadd.s32 %s115, 1
      %p119 = scmp.eq.s32.totalorder %s20, 1
      %p120 = scmp.ne.s32.totalorder %s115, %s117
      %p121 = scmp.eq.s32.totalorder %s20, 0
      %p122 = por %p120, %p121
      %p123 = scmp.ne.s32.totalorder %s115, %s117
      %p124 = scmp.eq.s32.totalorder %s25, 1
      %p125 = por %p123, %p124
      %p126 = scmp.ne.s32.totalorder %s117, %s118
      %p127 = scmp.eq.s32.totalorder %s25, 0
      %p128 = por %p126, %p127
      %p129 = scmp.ne.s32.totalorder %s117, %s118
      %p130 = scmp.eq.s32.totalorder %s26, 1
      %p131 = por %p129, %p130
      %p133 = scmp.ne.s32.totalorder %s118, %s132
      %p134 = scmp.eq.s32.totalorder %s26, 0
      %p135 = por %p133, %p134
      %s137 = sadd.s32 %s136, 1
      %p140 = scmp.eq.s32.totalorder %s20, 1
      %p141 = scmp.ne.s32.totalorder %s136, %s138
      %p142 = scmp.eq.s32.totalorder %s20, 0
      %p143 = por %p141, %p142
      %p144 = scmp.ne.s32.totalorder %s136, %s138
      %p145 = scmp.eq.s32.totalorder %s25, 1
      %p146 = por %p144, %p145
      %p147 = scmp.ne.s32.totalorder %s138, %s139
      %p148 = scmp.eq.s32.totalorder %s25, 0
      %p149 = por %p147, %p148
      %p150 = scmp.ne.s32.totalorder %s138, %s139
      %p151 = scmp.eq.s32.totalorder %s26, 1
      %p152 = por %p150, %p151
      %p154 = scmp.ne.s32.totalorder %s139, %s153
      %p155 = scmp.eq.s32.totalorder %s26, 0
      %p156 = por %p154, %p155
      %s158 = sadd.s32 %s157, 1
      %p161 = scmp.eq.s32.totalorder %s20, 1
      %p162 = scmp.ne.s32.totalorder %s157, %s159
      %p163 = scmp.eq.s32.totalorder %s20, 0
      %p164 = por %p162, %p163
      %p165 = scmp.ne.s32.totalorder %s157, %s159
      %p166 = scmp.eq.s32.totalorder %s25, 1
      %p167 = por %p165, %p166
      %p168 = scmp.ne.s32.totalorder %s159, %s160
      %p169 = scmp.eq.s32.totalorder %s25, 0
      %p170 = por %p168, %p169
      %p171 = scmp.ne.s32.totalorder %s159, %s160
      %p172 = scmp.eq.s32.totalorder %s26, 1
      %p173 = por %p171, %p172
      %p175 = scmp.ne.s32.totalorder %s160, %s174
      %p176 = scmp.eq.s32.totalorder %s26, 0
      %p177 = por %p175, %p176
      %s179 = sadd.s32 %s178, 1
      %p182 = scmp.eq.s32.totalorder %s20, 1
      %p183 = scmp.ne.s32.totalorder %s178, %s180
      %p184 = scmp.eq.s32.totalorder %s20, 0
      %p185 = por %p183, %p184
      %p186 = scmp.ne.s32.totalorder %s178, %s180
      %p187 = scmp.eq.s32.totalorder %s25, 1
      %p188 = por %p186, %p187
      %p189 = scmp.ne.s32.totalorder %s180, %s181
      %p190 = scmp.eq.s32.totalorder %s25, 0
      %p191 = por %p189, %p190
      %p192 = scmp.ne.s32.totalorder %s180, %s181
      %p193 = scmp.eq.s32.totalorder %s26, 1
      %p194 = por %p192, %p193
      %p196 = scmp.ne.s32.totalorder %s181, %s195
      %p197 = scmp.eq.s32.totalorder %s26, 0
      %p198 = por %p196, %p197
      %s200 = sadd.s32 %s199, 1
      %p203 = scmp.eq.s32.totalorder %s20, 1
      %p204 = scmp.ne.s32.totalorder %s199, %s201
      %p205 = scmp.eq.s32.totalorder %s20, 0
      %p206 = por %p204, %p205
      %p207 = scmp.ne.s32.totalorder %s199, %s201
      %p208 = scmp.eq.s32.totalorder %s25, 1
      %p209 = por %p207, %p208
      %p210 = scmp.ne.s32.totalorder %s201, %s202
      %p211 = scmp.eq.s32.totalorder %s25, 0
      %p212 = por %p210, %p211
      %p213 = scmp.ne.s32.totalorder %s201, %s202
      %p214 = scmp.eq.s32.totalorder %s26, 1
      %p215 = por %p213, %p214
      %p217 = scmp.ne.s32.totalorder %s202, %s216
      %p218 = scmp.eq.s32.totalorder %s26, 0
      %p219 = por %p217, %p218
      %s220 = ssub.s32 %s27, %s39
      %p221 = scmp.eq.s32.totalorder %s220, 0
      %s223 = sadd.s32 %s222, 1
      %s224 = scalar_select %p221, %s222, %s223
      %p227 = pneg %p221
      %p228 = scmp.eq.s32.totalorder %s20, 1
      %p229 = por %p227, %p228
      %p230 = scmp.ne.s32.totalorder %s222, %s225
      %p231 = scmp.eq.s32.totalorder %s20, 0
      %p232 = por %p230, %p231
      %p233 = scmp.ne.s32.totalorder %s222, %s225
      %p234 = scmp.eq.s32.totalorder %s25, 1
      %p235 = por %p233, %p234
      %p236 = scmp.ne.s32.totalorder %s225, %s226
      %p237 = scmp.eq.s32.totalorder %s25, 0
      %p238 = por %p236, %p237
      %p239 = scmp.ne.s32.totalorder %s225, %s226
      %p240 = scmp.eq.s32.totalorder %s26, 1
      %p241 = por %p239, %p240
      %p243 = scmp.ne.s32.totalorder %s226, %s242
      %p244 = scmp.eq.s32.totalorder %s26, 0
      %p245 = por %p243, %p244
      %p246 = scmp.le.s32.totalorder 1, %s20
      %p247 = scmp.lt.s32.totalorder %s20, 3
      %p248 = pnand %p246, %p247
      %p249 = pneg %p248
      // Predicated region
      $region9: #{tpu_custom_call.1} parent=5 // pred_check
        _
      $region10: #{tpu_custom_call.1} parent=5 // pred_check_branch
        %251 = sbr.rel (%p248) target = $region12
      $region11: #{tpu_custom_call.1} parent=5 // pred_region
        %s252 = ssub.s32 %s20, 1
        // Predicated region
        $region13: #{tpu_custom_call.1} parent=11 // pred_check
          %p253 = pneg %p58
        $region14: #{tpu_custom_call.1} parent=11 // pred_check_branch
          %255 = sbr.rel (%p253) target = $region16
        $region15: #{tpu_custom_call.1} parent=11 // pred_region
          %p256 = scmp.lt.s32.totalorder %s29, 0
          %s257 = scalar_select %p256, %s29, 0
          %s258 = smul.addr %s257, 8
          %s259 = scalar_lea.vmem %s0, %s258
        $region16: #{tpu_custom_call.1} parent=11 // pred_fallthru
          _
        // Predicated region
        $region17: #{tpu_custom_call.1} parent=11 // pred_check
          %p260 = pneg %p107
        $region18: #{tpu_custom_call.1} parent=11 // pred_check_branch
          %262 = sbr.rel (%p260) target = $region20
        $region19: #{tpu_custom_call.1} parent=11 // pred_region
          %s264 = ssub.s32 3072, 3072
          %265 = vsyncadd [#allocation8], %s264
          %s266 = sshll.u32 [#allocation7], 4
          %s267 = int_to_ptr.vmem [resolvable:$true] %s266
          %272 = dma.hbm_to_vmem [thread:$0]  %s2, 3072, %s267, [#allocation8], 384, 384, 24
        $region20: #{tpu_custom_call.1} parent=11 // pred_fallthru
          _
        // Predicated region
        $region21: #{tpu_custom_call.1} parent=11 // pred_check
          %p273 = pneg %p128
        $region22: #{tpu_custom_call.1} parent=11 // pred_check_branch
          %275 = sbr.rel (%p273) target = $region24
        $region23: #{tpu_custom_call.1} parent=11 // pred_region
          _
        $region24: #{tpu_custom_call.1} parent=11 // pred_fallthru
          _
        // Predicated region
        $region25: #{tpu_custom_call.1} parent=11 // pred_check
          %p276 = pneg %p149
        $region26: #{tpu_custom_call.1} parent=11 // pred_check_branch
          %278 = sbr.rel (%p276) target = $region28
        $region27: #{tpu_custom_call.1} parent=11 // pred_region
          %s280 = ssub.s32 6144, 6144
          %281 = vsyncadd [#allocation8], %s280
          %s282 = sshll.u32 [#allocation9], 4
          %s283 = int_to_ptr.vmem [resolvable:$true] %s282
          %288 = dma.hbm_to_vmem [thread:$0]  %s4, 6144, %s283, [#allocation8], 384, 384, 24
        $region28: #{tpu_custom_call.1} parent=11 // pred_fallthru
          _
        // Predicated region
        $region29: #{tpu_custom_call.1} parent=11 // pred_check
          %p289 = pneg %p170
        $region30: #{tpu_custom_call.1} parent=11 // pred_check_branch
          %291 = sbr.rel (%p289) target = $region32
        $region31: #{tpu_custom_call.1} parent=11 // pred_region
          _
        $region32: #{tpu_custom_call.1} parent=11 // pred_fallthru
          _
        // Predicated region
        $region33: #{tpu_custom_call.1} parent=11 // pred_check
          %p292 = pneg %p191
        $region34: #{tpu_custom_call.1} parent=11 // pred_check_branch
          %294 = sbr.rel (%p292) target = $region36
        $region35: #{tpu_custom_call.1} parent=11 // pred_region
          %s296 = ssub.s32 2048, 2048
          %297 = vsyncadd [#allocation11], %s296
          %s298 = sshll.u32 [#allocation10], 4
          %s299 = int_to_ptr.vmem [resolvable:$true] %s298
          %304 = dma.hbm_to_vmem [thread:$0]  %s6, 2048, %s299, [#allocation11], 128, 128, 8
        $region36: #{tpu_custom_call.1} parent=11 // pred_fallthru
          _
        // Predicated region
        $region37: #{tpu_custom_call.1} parent=11 // pred_check
          %p305 = pneg %p212
        $region38: #{tpu_custom_call.1} parent=11 // pred_check_branch
          %307 = sbr.rel (%p305) target = $region40
        $region39: #{tpu_custom_call.1} parent=11 // pred_region
          _
        $region40: #{tpu_custom_call.1} parent=11 // pred_fallthru
          _
      $region12: #{tpu_custom_call.1} parent=5 // pred_fallthru
        _
      %p308 = scmp.lt.s32.totalorder %s20, 2
      // Predicated region
      $region41: #{tpu_custom_call.1} parent=5 // pred_check
        %p309 = pneg %p308
      $region42: #{tpu_custom_call.1} parent=5 // pred_check_branch
        %311 = sbr.rel (%p309) target = $region44
      $region43: #{tpu_custom_call.1} parent=5 // pred_region
        // Predicated region
        $region45: #{tpu_custom_call.1} parent=43 // pred_check
          %p312 = pneg %p80
        $region46: #{tpu_custom_call.1} parent=43 // pred_check_branch
          %314 = sbr.rel (%p312) target = $region48
        $region47: #{tpu_custom_call.1} parent=43 // pred_region
          %s315 = sand.u32 %s70, 1
          %s316 = scalar_lea.sflag [#allocation5], %s315
          %s317 = sand.u32 %s70, 1
          %s318 = smul.addr %s317, 16
          %s319 = scalar_lea.vmem [#allocation4], %s318
          %s320 = smul.u32 4, %s28
          %s322 = ssub.s32 256, 256
          %323 = vsyncadd %s316, %s322
          %s324 = smul.addr %s27, 8
          %s325 = sadd.s32 %s320, %s324
          %s326 = smul.addr %s325, 64
          %s327 = scalar_lea.hbm %s1, %s326
          %s328 = sshll.u32 %s319, 4
          %s329 = int_to_ptr.vmem [resolvable:$true] %s328
          %334 = dma.hbm_to_vmem [thread:$0]  %s327, 256, %s329, %s316, 64, 64, 4
        $region48: #{tpu_custom_call.1} parent=43 // pred_fallthru
          _
      $region44: #{tpu_custom_call.1} parent=5 // pred_fallthru
        _
      %p335 = scmp.le.s32.totalorder 1, %s20
      %p336 = scmp.lt.s32.totalorder %s20, 3
      %p337 = pnand %p335, %p336
      %p338 = pneg %p337
      // Predicated region
      $region49: #{tpu_custom_call.1} parent=5 // pred_check
        _
      $region50: #{tpu_custom_call.1} parent=5 // pred_check_branch
        %340 = sbr.rel (%p337) target = $region52
      $region51: #{tpu_custom_call.1} parent=5 // pred_region
        %s341 = ssub.s32 %s20, 1
        %s342 = sand.u32 %s73, 1
        %s343 = scalar_lea.sflag [#allocation5], %s342
        %s344 = sand.u32 %s73, 1
        %s345 = smul.addr %s344, 16
        %s346 = scalar_lea.vmem [#allocation4], %s345
        // Predicated region
        $region53: #{tpu_custom_call.1} parent=51 // pred_check
          %p347 = pneg %p86
        $region54: #{tpu_custom_call.1} parent=51 // pred_check_branch
          %349 = sbr.rel (%p347) target = $region56
        $region55: #{tpu_custom_call.1} parent=51 // pred_region
          %350 = dma.done %s343, 256
        $region56: #{tpu_custom_call.1} parent=51 // pred_fallthru
          _
        // Predicated region
        $region57: #{tpu_custom_call.1} parent=51 // pred_check
          %p351 = pneg %p107
        $region58: #{tpu_custom_call.1} parent=51 // pred_check_branch
          %353 = sbr.rel (%p351) target = $region60
        $region59: #{tpu_custom_call.1} parent=51 // pred_region
          %354 = dma.done [#allocation8], 3072
        $region60: #{tpu_custom_call.1} parent=51 // pred_fallthru
          _
        // Predicated region
        $region61: #{tpu_custom_call.1} parent=51 // pred_check
          %p355 = pneg %p149
        $region62: #{tpu_custom_call.1} parent=51 // pred_check_branch
          %357 = sbr.rel (%p355) target = $region64
        $region63: #{tpu_custom_call.1} parent=51 // pred_region
          %358 = dma.done [#allocation8], 6144
        $region64: #{tpu_custom_call.1} parent=51 // pred_fallthru
          _
        // Predicated region
        $region65: #{tpu_custom_call.1} parent=51 // pred_check
          %p359 = pneg %p191
        $region66: #{tpu_custom_call.1} parent=51 // pred_check_branch
          %361 = sbr.rel (%p359) target = $region68
        $region67: #{tpu_custom_call.1} parent=51 // pred_region
          %362 = dma.done [#allocation11], 2048
        $region68: #{tpu_custom_call.1} parent=51 // pred_fallthru
          _
        %p363 = scmp.lt.s32.totalorder %s29, 0
        %s364 = scalar_select %p363, %s29, 0
        %s365 = smul.addr %s364, 8
        %s366 = scalar_lea.vmem %s0, %s365
        %p367 = pneg %p58
        %p368 = pneg %p55
        %s369 = sand.u32 %s73, 1
        %s370 = scalar_lea.sflag [#allocation5], %s369
        %s371 = sand.u32 %s73, 1
        %s372 = smul.addr %s371, 16
        %s373 = scalar_lea.vmem [#allocation4], %s372
        %p374 = pneg %p86
        %p375 = pneg %p83
        %p376 = pneg %p107
        %p377 = pneg %p104
        %p378 = pneg %p128
        %p379 = pneg %p125
        %p380 = pneg %p149
        %p381 = pneg %p146
        %p382 = pneg %p170
        %p383 = pneg %p167
        %p384 = pneg %p191
        %p385 = pneg %p188
        %p386 = pneg %p212
        %p387 = pneg %p209
        %p388 = pneg %p238
        %p389 = pneg %p235
        %p390 = scmp.lt.s32.totalorder %s29, 0
        %s391 = scalar_select %p390, %s29, 0
        %s392 = smul.addr %s391, 8
        %s393 = scalar_lea.vmem %s0, %s392
        %s394 = smul.u32 4, %s30
        %p395 = scmp.eq.s32.totalorder %s30, 0
        // Predicated region
        $region69: #{tpu_custom_call.1} parent=51 // pred_check
          %p396 = pneg %p395
        $region70: #{tpu_custom_call.1} parent=51 // pred_check_branch
          %398 = sbr.rel (%p396) target = $region72
        $region71: #{tpu_custom_call.1} parent=51 // pred_region
          %399 = vst [vmem:[#allocation2] sm:$0xff] 0.0
        $region72: #{tpu_custom_call.1} parent=51 // pred_fallthru
          _
        %v400 = vld [vmem:[%s346] sm:$0xf]
        %v401 = vld [vmem:[%s346 + $0x4] sm:$0xf]
        %v402 = vld [vmem:[%s346 + $0x8] sm:$0xf]
        %v403 = vld [vmem:[%s346 + $0xc] sm:$0xf]
        %v404 = vunpack.c.l.bf16 %v400
        %v405 = vunpack.c.l.bf16 %v401
        %v406 = vunpack.c.l.bf16 %v402
        %v407 = vunpack.c.l.bf16 %v403
        %v408 = vld [vmem:[#allocation7] sm:$0xff]
        %v409 = vld [vmem:[#allocation7 + $0x8] sm:$0xff]
        %v410 = vld [vmem:[#allocation7 + $0x10] sm:$0xff]
        %v411 = vld [vmem:[#allocation7 + $0x18] sm:$0xff]
        %v412 = vld [vmem:[#allocation7 + $0x20] sm:$0xff]
        %v413 = vld [vmem:[#allocation7 + $0x28] sm:$0xff]
        %v414 = vld [vmem:[#allocation7 + $0x30] sm:$0xff]
        %v415 = vld [vmem:[#allocation7 + $0x38] sm:$0xff]
        %v416 = vld [vmem:[#allocation7 + $0x40] sm:$0xff]
        %v417 = vld [vmem:[#allocation7 + $0x48] sm:$0xff]
        %v418 = vld [vmem:[#allocation7 + $0x50] sm:$0xff]
        %v419 = vld [vmem:[#allocation7 + $0x58] sm:$0xff]
        %v420 = vld [vmem:[#allocation7 + $0x60] sm:$0xff]
        %v421 = vld [vmem:[#allocation7 + $0x68] sm:$0xff]
        %v422 = vld [vmem:[#allocation7 + $0x70] sm:$0xff]
        %v423 = vld [vmem:[#allocation7 + $0x78] sm:$0xff]
        %v424 = vld [vmem:[#allocation7 + $0x80] sm:$0xff]
        %v425 = vld [vmem:[#allocation7 + $0x88] sm:$0xff]
        %v426 = vld [vmem:[#allocation7 + $0x90] sm:$0xff]
        %v427 = vld [vmem:[#allocation7 + $0x98] sm:$0xff]
        %v428 = vld [vmem:[#allocation7 + $0xa0] sm:$0xff]
        %v429 = vld [vmem:[#allocation7 + $0xa8] sm:$0xff]
        %v430 = vld [vmem:[#allocation7 + $0xb0] sm:$0xff]
        %v431 = vld [vmem:[#allocation7 + $0xb8] sm:$0xff]
        %v432 = vld [vmem:[%s3] sm:$0x7]
        %v434 = vlaneseq
        %v435 = vshrl.u32 %v434, 7
        %v436 = vsub.s32 0, %v435
        %v437 = vrot.slane %v432, %v436
        %v438 = vlaneseq
        %v439 = vshrl.u32 %v438, 7
        %v440 = vsub.s32 1, %v439
        %v441 = vrot.slane %v432, %v440
        %v442 = vlaneseq
        %v443 = vshrl.u32 %v442, 7
        %v444 = vsub.s32 2, %v443
        %v445 = vrot.slane %v432, %v444
        %vm449 = vcmask 523264
        %v451 = vsel %vm449, %v404, 0
        %v454 = vsel %vm449, %v405, 0
        %v457 = vsel %vm449, %v406, 0
        %v460 = vsel %vm449, %v407, 0
        %462 = vmatprep.subr.mxu0 %v409
        %463 = vmatpush1.msra.mxu0 %v408
        %464 = vmatprep.subr.mxu0 %v412
        %465 = vmatpush1.msra.mxu0 %v411
        %466 = vmatprep.subr.mxu0 %v415
        %467 = vmatpush1.msra.mxu0 %v414
        %468 = vmatprep.subr.mxu0 %v418
        %469 = vmatpush1.msra.mxu0 %v417
        %470 = vmatprep.subr.mxu0 %v421
        %471 = vmatpush1.msra.mxu0 %v420
        %472 = vmatprep.subr.mxu0 %v424
        %473 = vmatpush1.msra.mxu0 %v423
        %474 = vmatprep.subr.mxu0 %v427
        %475 = vmatpush1.msra.mxu0 %v426
        %476 = vmatprep.subr.mxu0 %v430
        %477 = vmatpush1.msra.mxu0 %v429
        %478 = vmatprep.subr.mxu0 0.0
        %479 = vmatpush1.msra.mxu0 0.0
        %480 = vmatprep.subr.mxu0 0.0
        %481 = vmatpush1.msra.mxu0 0.0
        %482 = vmatprep.subr.mxu0 0.0
        %483 = vmatpush1.msra.mxu0 0.0
        %484 = vmatprep.subr.mxu0 0.0
        %485 = vmatpush1.msra.mxu0 0.0
        %486 = vmatprep.subr.mxu0 0.0
        %487 = vmatpush1.msra.mxu0 0.0
        %488 = vmatprep.subr.mxu0 0.0
        %489 = vmatpush1.msra.mxu0 0.0
        %490 = vmatprep.subr.mxu0 0.0
        %491 = vmatpush1.msra.mxu0 0.0
        %492 = vmatprep.subr.mxu0 0.0
        %493 = vmatpush1.msra.mxu0 0.0
        %494 = vmatprep.subr.mxu0 0.0
        %495 = vmatpush1.msra.mxu0 0.0
        %496 = vmatprep.subr.mxu0 0.0
        %497 = vmatpush1.msra.mxu0 0.0
        %498 = vmatprep.subr.mxu0 0.0
        %499 = vmatpush1.msra.mxu0 0.0
        %500 = vmatprep.subr.mxu0 0.0
        %501 = vmatpush1.msra.mxu0 0.0
        %502 = vmatprep.subr.mxu0 0.0
        %503 = vmatpush1.msra.mxu0 0.0
        %504 = vmatprep.subr.mxu0 0.0
        %505 = vmatpush1.msra.mxu0 0.0
        %506 = vmatprep.subr.mxu0 0.0
        %507 = vmatpush1.msra.mxu0 0.0
        %508 = vmatprep.subr.mxu0 0.0
        %509 = vmatpush1.msra.mxu0 0.0
        %510 = vmatprep.subr.mxu0 0.0
        %511 = vmatpush1.msra.mxu0 0.0
        %512 = vmatprep.subr.mxu0 0.0
        %513 = vmatpush1.msra.mxu0 0.0
        %514 = vmatprep.subr.mxu0 0.0
        %515 = vmatpush1.msra.mxu0 0.0
        %516 = vmatprep.subr.mxu0 0.0
        %517 = vmatpush1.msra.mxu0 0.0
        %518 = vmatprep.subr.mxu0 0.0
        %519 = vmatpush1.msra.mxu0 0.0
        %520 = vmatprep.subr.mxu0 0.0
        %521 = vmatpush1.msra.mxu0 0.0
        %522 = vmatprep.subr.mxu0 0.0
        %523 = vmatpush1.msra.mxu0 0.0
        %524 = vmatprep.subr.mxu0 0.0
        %525 = vmatpush1.msra.mxu0 0.0
        %526 = vmatprep.mubr.f32.mxu0 0.0
        %527 = vmatmul.mubr.f32.gmra.mrb[0].mxu0 %v451
        %v528 = vpop.f32.mrb[0].mxu0
        %v529 = vadd.f32 %v437, %v528
        %v530 = vpop.f32.mrb[0].mxu0
        %v531 = vadd.f32 %v441, %v530
        %532 = vmatprep.mubr.f32.mxu0 0.0
        %533 = vmatmul.mubr.f32.gmra.mrb[0].mxu0 %v454
        %v534 = vpop.f32.mrb[0].mxu0
        %v535 = vadd.f32 %v437, %v534
        %v536 = vpop.f32.mrb[0].mxu0
        %v537 = vadd.f32 %v441, %v536
        %538 = vmatprep.mubr.f32.mxu0 0.0
        %539 = vmatmul.mubr.f32.gmra.mrb[0].mxu0 %v457
        %v540 = vpop.f32.mrb[0].mxu0
        %v541 = vadd.f32 %v437, %v540
        %v542 = vpop.f32.mrb[0].mxu0
        %v543 = vadd.f32 %v441, %v542
        %544 = vmatprep.mubr.f32.mxu0 0.0
        %545 = vmatmul.mubr.f32.gmra.mrb[0].mxu0 %v460
        %v546 = vpop.f32.mrb[0].mxu0
        %v547 = vadd.f32 %v437, %v546
        %v548 = vpop.f32.mrb[0].mxu0
        %v549 = vadd.f32 %v441, %v548
        %550 = vdwg.mxu0
        %551 = vmatprep.subr.mxu0 0.0
        %552 = vmatpush1.msra.mxu0 %v410
        %553 = vmatprep.subr.mxu0 0.0
        %554 = vmatpush1.msra.mxu0 %v413
        %555 = vmatprep.subr.mxu0 0.0
        %556 = vmatpush1.msra.mxu0 %v416
        %557 = vmatprep.subr.mxu0 0.0
        %558 = vmatpush1.msra.mxu0 %v419
        %559 = vmatprep.subr.mxu0 0.0
        %560 = vmatpush1.msra.mxu0 %v422
        %561 = vmatprep.subr.mxu0 0.0
        %562 = vmatpush1.msra.mxu0 %v425
        %563 = vmatprep.subr.mxu0 0.0
        %564 = vmatpush1.msra.mxu0 %v428
        %565 = vmatprep.subr.mxu0 0.0
        %566 = vmatpush1.msra.mxu0 %v431
        %567 = vmatprep.subr.mxu0 0.0
        %568 = vmatpush1.msra.mxu0 0.0
        %569 = vmatprep.subr.mxu0 0.0
        %570 = vmatpush1.msra.mxu0 0.0
        %571 = vmatprep.subr.mxu0 0.0
        %572 = vmatpush1.msra.mxu0 0.0
        %573 = vmatprep.subr.mxu0 0.0
        %574 = vmatpush1.msra.mxu0 0.0
        %575 = vmatprep.subr.mxu0 0.0
        %576 = vmatpush1.msra.mxu0 0.0
        %577 = vmatprep.subr.mxu0 0.0
        %578 = vmatpush1.msra.mxu0 0.0
        %579 = vmatprep.subr.mxu0 0.0
        %580 = vmatpush1.msra.mxu0 0.0
        %581 = vmatprep.subr.mxu0 0.0
        %582 = vmatpush1.msra.mxu0 0.0
        %583 = vmatprep.subr.mxu0 0.0
        %584 = vmatpush1.msra.mxu0 0.0
        %585 = vmatprep.subr.mxu0 0.0
        %586 = vmatpush1.msra.mxu0 0.0
        %587 = vmatprep.subr.mxu0 0.0
        %588 = vmatpush1.msra.mxu0 0.0
        %589 = vmatprep.subr.mxu0 0.0
        %590 = vmatpush1.msra.mxu0 0.0
        %591 = vmatprep.subr.mxu0 0.0
        %592 = vmatpush1.msra.mxu0 0.0
        %593 = vmatprep.subr.mxu0 0.0
        %594 = vmatpush1.msra.mxu0 0.0
        %595 = vmatprep.subr.mxu0 0.0
        %596 = vmatpush1.msra.mxu0 0.0
        %597 = vmatprep.subr.mxu0 0.0
        %598 = vmatpush1.msra.mxu0 0.0
        %599 = vmatprep.subr.mxu0 0.0
        %600 = vmatpush1.msra.mxu0 0.0
        %601 = vmatprep.subr.mxu0 0.0
        %602 = vmatpush1.msra.mxu0 0.0
        %603 = vmatprep.subr.mxu0 0.0
        %604 = vmatpush1.msra.mxu0 0.0
        %605 = vmatprep.subr.mxu0 0.0
        %606 = vmatpush1.msra.mxu0 0.0
        %607 = vmatprep.subr.mxu0 0.0
        %608 = vmatpush1.msra.mxu0 0.0
        %609 = vmatprep.subr.mxu0 0.0
        %610 = vmatpush1.msra.mxu0 0.0
        %611 = vmatprep.subr.mxu0 0.0
        %612 = vmatpush1.msra.mxu0 0.0
        %613 = vmatprep.subr.mxu0 0.0
        %614 = vmatpush1.msra.mxu0 0.0
        %615 = vmatprep.mubr.f32.mxu0 0.0
        %616 = vmatmul.mubr.f32.gmra.mrb[0].mxu0 %v451
        %v617 = vpop.f32.mrb[0].mxu0
        %v618 = vadd.f32 %v445, %v617
        %v619 = vpop.f32.mrb[0].mxu0
        %620 = vmatprep.mubr.f32.mxu0 0.0
        %621 = vmatmul.mubr.f32.gmra.mrb[0].mxu0 %v454
        %v622 = vpop.f32.mrb[0].mxu0
        %v623 = vadd.f32 %v445, %v622
        %v624 = vpop.f32.mrb[0].mxu0
        %625 = vmatprep.mubr.f32.mxu0 0.0
        %626 = vmatmul.mubr.f32.gmra.mrb[0].mxu0 %v457
        %v627 = vpop.f32.mrb[0].mxu0
        %v628 = vadd.f32 %v445, %v627
        %v629 = vpop.f32.mrb[0].mxu0
        %630 = vmatprep.mubr.f32.mxu0 0.0
        %631 = vmatmul.mubr.f32.gmra.mrb[0].mxu0 %v460
        %v632 = vpop.f32.mrb[0].mxu0
        %v633 = vadd.f32 %v445, %v632
        %v634 = vpop.f32.mrb[0].mxu0
        %635 = vdwg.mxu0
        %636 = vst [vmem:[#allocation3] sm:$0xff] %v529
        %637 = vst [vmem:[#allocation3 + $0x8] sm:$0xff] %v531
        %638 = vst [vmem:[#allocation3 + $0x10] sm:$0xff] %v618
        %639 = vst [vmem:[#allocation3 + $0x18] sm:$0xff] %v535
        %640 = vst [vmem:[#allocation3 + $0x20] sm:$0xff] %v537
        %641 = vst [vmem:[#allocation3 + $0x28] sm:$0xff] %v623
        %642 = vst [vmem:[#allocation3 + $0x30] sm:$0xff] %v541
        %643 = vst [vmem:[#allocation3 + $0x38] sm:$0xff] %v543
        %644 = vst [vmem:[#allocation3 + $0x40] sm:$0xff] %v628
        %645 = vst [vmem:[#allocation3 + $0x48] sm:$0xff] %v547
        %646 = vst [vmem:[#allocation3 + $0x50] sm:$0xff] %v549
        %647 = vst [vmem:[#allocation3 + $0x58] sm:$0xff] %v633
        %v648 = vld [vmem:[%s393] sm:$0xff]
        %v649 = vld [vmem:[%s5] sm:$0x1]
        %v650 = vlaneseq
        %v651 = vand.u32 %v650, 127
        %s652 = smul.u32 %s30, 4
        %v653 = vld [vmem:[#allocation2] sm:$0xff]
        %s654 = smul.u32 0, 3
        %s655 = smul.addr %s654, 8
        %s656 = scalar_lea.vmem [#allocation3], %s655
        %v657 = vld [vmem:[%s656] sm:$0xff]
        %v658 = vld [vmem:[%s656 + $0x8] sm:$0xff]
        %v659 = vld [vmem:[%s656 + $0x10] sm:$0xff]
        %v660 = vld [vmem:[#allocation9] sm:$0xff]
        %v661 = vld [vmem:[#allocation9 + $0x8] sm:$0xff]
        %v662 = vld [vmem:[#allocation9 + $0x10] sm:$0xff]
        %v663 = vld [vmem:[#allocation9 + $0x18] sm:$0xff]
        %v664 = vld [vmem:[#allocation9 + $0x20] sm:$0xff]
        %v665 = vld [vmem:[#allocation9 + $0x28] sm:$0xff]
        %v666 = vld [vmem:[#allocation9 + $0x30] sm:$0xff]
        %v667 = vld [vmem:[#allocation9 + $0x38] sm:$0xff]
        %v668 = vld [vmem:[#allocation9 + $0x40] sm:$0xff]
        %v669 = vld [vmem:[#allocation9 + $0x48] sm:$0xff]
        %v670 = vld [vmem:[#allocation9 + $0x50] sm:$0xff]
        %v671 = vld [vmem:[#allocation9 + $0x58] sm:$0xff]
        %v672 = vld [vmem:[#allocation9 + $0x60] sm:$0xff]
        %v673 = vld [vmem:[#allocation9 + $0x68] sm:$0xff]
        %v674 = vld [vmem:[#allocation9 + $0x70] sm:$0xff]
        %v675 = vld [vmem:[#allocation9 + $0x78] sm:$0xff]
        %v676 = vld [vmem:[#allocation9 + $0x80] sm:$0xff]
        %v677 = vld [vmem:[#allocation9 + $0x88] sm:$0xff]
        %v678 = vld [vmem:[#allocation9 + $0x90] sm:$0xff]
        %v679 = vld [vmem:[#allocation9 + $0x98] sm:$0xff]
        %v680 = vld [vmem:[#allocation9 + $0xa0] sm:$0xff]
        %v681 = vld [vmem:[#allocation9 + $0xa8] sm:$0xff]
        %v682 = vld [vmem:[#allocation9 + $0xb0] sm:$0xff]
        %v683 = vld [vmem:[#allocation9 + $0xb8] sm:$0xff]
        %v684 = vld [vmem:[#allocation9 + $0xc0] sm:$0xff]
        %v685 = vld [vmem:[#allocation9 + $0xc8] sm:$0xff]
        %v686 = vld [vmem:[#allocation9 + $0xd0] sm:$0xff]
        %v687 = vld [vmem:[#allocation9 + $0xd8] sm:$0xff]
        %v688 = vld [vmem:[#allocation9 + $0xe0] sm:$0xff]
        %v689 = vld [vmem:[#allocation9 + $0xe8] sm:$0xff]
        %v690 = vld [vmem:[#allocation9 + $0xf0] sm:$0xff]
        %v691 = vld [vmem:[#allocation9 + $0xf8] sm:$0xff]
        %v692 = vld [vmem:[#allocation9 + $0x100] sm:$0xff]
        %v693 = vld [vmem:[#allocation9 + $0x108] sm:$0xff]
        %v694 = vld [vmem:[#allocation9 + $0x110] sm:$0xff]
        %v695 = vld [vmem:[#allocation9 + $0x118] sm:$0xff]
        %v696 = vld [vmem:[#allocation9 + $0x120] sm:$0xff]
        %v697 = vld [vmem:[#allocation9 + $0x128] sm:$0xff]
        %v698 = vld [vmem:[#allocation9 + $0x130] sm:$0xff]
        %v699 = vld [vmem:[#allocation9 + $0x138] sm:$0xff]
        %v700 = vld [vmem:[#allocation9 + $0x140] sm:$0xff]
        %v701 = vld [vmem:[#allocation9 + $0x148] sm:$0xff]
        %v702 = vld [vmem:[#allocation9 + $0x150] sm:$0xff]
        %v703 = vld [vmem:[#allocation9 + $0x158] sm:$0xff]
        %v704 = vld [vmem:[#allocation9 + $0x160] sm:$0xff]
        %v705 = vld [vmem:[#allocation9 + $0x168] sm:$0xff]
        %v706 = vld [vmem:[#allocation9 + $0x170] sm:$0xff]
        %v707 = vld [vmem:[#allocation9 + $0x178] sm:$0xff]
        %708 = vmatprep.subr.mxu0 %v661
        %709 = vmatpush1.msra.mxu0 %v660
        %710 = vmatprep.subr.mxu0 %v664
        %711 = vmatpush1.msra.mxu0 %v663
        %712 = vmatprep.subr.mxu0 %v667
        %713 = vmatpush1.msra.mxu0 %v666
        %714 = vmatprep.subr.mxu0 %v670
        %715 = vmatpush1.msra.mxu0 %v669
        %716 = vmatprep.subr.mxu0 %v673
        %717 = vmatpush1.msra.mxu0 %v672
        %718 = vmatprep.subr.mxu0 %v676
        %719 = vmatpush1.msra.mxu0 %v675
        %720 = vmatprep.subr.mxu0 %v679
        %721 = vmatpush1.msra.mxu0 %v678
        %722 = vmatprep.subr.mxu0 %v682
        %723 = vmatpush1.msra.mxu0 %v681
        %724 = vmatprep.subr.mxu0 %v685
        %725 = vmatpush1.msra.mxu0 %v684
        %726 = vmatprep.subr.mxu0 %v688
        %727 = vmatpush1.msra.mxu0 %v687
        %728 = vmatprep.subr.mxu0 %v691
        %729 = vmatpush1.msra.mxu0 %v690
        %730 = vmatprep.subr.mxu0 %v694
        %731 = vmatpush1.msra.mxu0 %v693
        %732 = vmatprep.subr.mxu0 %v697
        %733 = vmatpush1.msra.mxu0 %v696
        %734 = vmatprep.subr.mxu0 %v700
        %735 = vmatpush1.msra.mxu0 %v699
        %736 = vmatprep.subr.mxu0 %v703
        %737 = vmatpush1.msra.mxu0 %v702
        %738 = vmatprep.subr.mxu0 %v706
        %739 = vmatpush1.msra.mxu0 %v705
        %740 = vmatprep.subr.mxu0 0.0
        %741 = vmatpush1.msra.mxu0 0.0
        %742 = vmatprep.subr.mxu0 0.0
        %743 = vmatpush1.msra.mxu0 0.0
        %744 = vmatprep.subr.mxu0 0.0
        %745 = vmatpush1.msra.mxu0 0.0
        %746 = vmatprep.subr.mxu0 0.0
        %747 = vmatpush1.msra.mxu0 0.0
        %748 = vmatprep.subr.mxu0 0.0
        %749 = vmatpush1.msra.mxu0 0.0
        %750 = vmatprep.subr.mxu0 0.0
        %751 = vmatpush1.msra.mxu0 0.0
        %752 = vmatprep.subr.mxu0 0.0
        %753 = vmatpush1.msra.mxu0 0.0
        %754 = vmatprep.subr.mxu0 0.0
        %755 = vmatpush1.msra.mxu0 0.0
        %756 = vmatprep.subr.mxu0 0.0
        %757 = vmatpush1.msra.mxu0 0.0
        %758 = vmatprep.subr.mxu0 0.0
        %759 = vmatpush1.msra.mxu0 0.0
        %760 = vmatprep.subr.mxu0 0.0
        %761 = vmatpush1.msra.mxu0 0.0
        %762 = vmatprep.subr.mxu0 0.0
        %763 = vmatpush1.msra.mxu0 0.0
        %764 = vmatprep.subr.mxu0 0.0
        %765 = vmatpush1.msra.mxu0 0.0
        %766 = vmatprep.subr.mxu0 0.0
        %767 = vmatpush1.msra.mxu0 0.0
        %768 = vmatprep.subr.mxu0 0.0
        %769 = vmatpush1.msra.mxu0 0.0
        %770 = vmatprep.subr.mxu0 0.0
        %771 = vmatpush1.msra.mxu0 0.0
        %772 = vmatprep.mubr.f32.mxu0 0.0
        %773 = vmatmul.mubr.f32.gmra.mrb[0].mxu0 %v653
        %v774 = vpop.f32.mrb[0].mxu0
        %v775 = vadd.f32 0.0, %v774
        %v776 = vpop.f32.mrb[0].mxu0
        %v777 = vadd.f32 0.0, %v776
        %778 = vdwg.mxu0
        %779 = vmatprep.subr.mxu0 0.0
        %780 = vmatpush1.msra.mxu0 %v662
        %781 = vmatprep.subr.mxu0 0.0
        %782 = vmatpush1.msra.mxu0 %v665
        %783 = vmatprep.subr.mxu0 0.0
        %784 = vmatpush1.msra.mxu0 %v668
        %785 = vmatprep.subr.mxu0 0.0
        %786 = vmatpush1.msra.mxu0 %v671
        %787 = vmatprep.subr.mxu0 0.0
        %788 = vmatpush1.msra.mxu0 %v674
        %789 = vmatprep.subr.mxu0 0.0
        %790 = vmatpush1.msra.mxu0 %v677
        %791 = vmatprep.subr.mxu0 0.0
        %792 = vmatpush1.msra.mxu0 %v680
        %793 = vmatprep.subr.mxu0 0.0
        %794 = vmatpush1.msra.mxu0 %v683
        %795 = vmatprep.subr.mxu0 0.0
        %796 = vmatpush1.msra.mxu0 %v686
        %797 = vmatprep.subr.mxu0 0.0
        %798 = vmatpush1.msra.mxu0 %v689
        %799 = vmatprep.subr.mxu0 0.0
        %800 = vmatpush1.msra.mxu0 %v692
        %801 = vmatprep.subr.mxu0 0.0
        %802 = vmatpush1.msra.mxu0 %v695
        %803 = vmatprep.subr.mxu0 0.0
        %804 = vmatpush1.msra.mxu0 %v698
        %805 = vmatprep.subr.mxu0 0.0
        %806 = vmatpush1.msra.mxu0 %v701
        %807 = vmatprep.subr.mxu0 0.0
        %808 = vmatpush1.msra.mxu0 %v704
        %809 = vmatprep.subr.mxu0 0.0
        %810 = vmatpush1.msra.mxu0 %v707
        %811 = vmatprep.subr.mxu0 0.0
        %812 = vmatpush1.msra.mxu0 0.0
        %813 = vmatprep.subr.mxu0 0.0
        %814 = vmatpush1.msra.mxu0 0.0
        %815 = vmatprep.subr.mxu0 0.0
        %816 = vmatpush1.msra.mxu0 0.0
        %817 = vmatprep.subr.mxu0 0.0
        %818 = vmatpush1.msra.mxu0 0.0
        %819 = vmatprep.subr.mxu0 0.0
        %820 = vmatpush1.msra.mxu0 0.0
        %821 = vmatprep.subr.mxu0 0.0
        %822 = vmatpush1.msra.mxu0 0.0
        %823 = vmatprep.subr.mxu0 0.0
        %824 = vmatpush1.msra.mxu0 0.0
        %825 = vmatprep.subr.mxu0 0.0
        %826 = vmatpush1.msra.mxu0 0.0
        %827 = vmatprep.subr.mxu0 0.0
        %828 = vmatpush1.msra.mxu0 0.0
        %829 = vmatprep.subr.mxu0 0.0
        %830 = vmatpush1.msra.mxu0 0.0
        %831 = vmatprep.subr.mxu0 0.0
        %832 = vmatpush1.msra.mxu0 0.0
        %833 = vmatprep.subr.mxu0 0.0
        %834 = vmatpush1.msra.mxu0 0.0
        %835 = vmatprep.subr.mxu0 0.0
        %836 = vmatpush1.msra.mxu0 0.0
        %837 = vmatprep.subr.mxu0 0.0
        %838 = vmatpush1.msra.mxu0 0.0
        %839 = vmatprep.subr.mxu0 0.0
        %840 = vmatpush1.msra.mxu0 0.0
        %841 = vmatprep.subr.mxu0 0.0
        %842 = vmatpush1.msra.mxu0 0.0
        %843 = vmatprep.mubr.f32.mxu0 0.0
        %844 = vmatmul.mubr.f32.gmra.mrb[0].mxu0 %v653
        %v845 = vpop.f32.mrb[0].mxu0
        %v846 = vadd.f32 0.0, %v845
        %v847 = vpop.f32.mrb[0].mxu0
        %848 = vdwg.mxu0
        %v849 = vadd.f32 %v657, %v775
        %v850 = vxor.u32 %v849, 2147483648
        %v851 = vmul.f32 %v850, 1.442695
        %v852 = vpow.pop %v851
        %v853 = vadd.f32 %v852, 1.0
        %v854 = vrcp.pop %v853
        %v855 = vmul.f32 1.0, %v854
        %v856 = vadd.f32 %v658, %v777
        %v857 = vxor.u32 %v856, 2147483648
        %v858 = vmul.f32 %v857, 1.442695
        %v859 = vpow.pop %v858
        %v860 = vadd.f32 %v859, 1.0
        %v861 = vrcp.pop %v860
        %v862 = vmul.f32 1.0, %v861
        %v864 = vlaneseq
        %v865 = vshrl.u32 %v864, 7
        %v866 = vsub.s32 0, %v865
        %v867 = vrot.slane %v649, %v866
        %v869 = vadd.f32 %v846, %v867
        %v870 = vmul.f32 %v855, %v869
        %v871 = vadd.f32 %v659, %v870
        %v872 = vtanh.pop %v871
        %v873 = vsub.f32 1.0, %v862
        %v874 = vmul.f32 %v873, %v872
        %v875 = vmul.f32 %v862, %v653
        %v876 = vadd.f32 %v874, %v875
        %vm877 = vcmp.lt.s32.totalorder %v651, 32
        %vm878 = vcmp.lt.s32.totalorder %v651, 64
        %s879 = ssub.s32 7, %s652
        %v880 = vstv %s879
        %v881 = vsel %vm878, %v880, 1073741824
        %v882 = vstv %s652
        %v883 = vsel %vm877, %v882, %v881
        %884 = vset.pattern.permute.xlu0 0
        %885 = vperm.xlu0 %884, %v648
        %v886 = vpop.permute.xlu0 %885
        %vm887 = vcmp.gt.s32.totalorder %v886, %v883
        %v888 = vsel %vm887, %v876, %v653
        %s889 = sadd.s32 %s652, 1
        %s890 = smul.u32 1, 3
        %s891 = smul.addr %s890, 8
        %s892 = scalar_lea.vmem [#allocation3], %s891
        %v893 = vld [vmem:[%s892] sm:$0xff]
        %v894 = vld [vmem:[%s892 + $0x8] sm:$0xff]
        %v895 = vld [vmem:[%s892 + $0x10] sm:$0xff]
        %896 = vmatprep.subr.mxu0 %v661
        %897 = vmatpush1.msra.mxu0 %v660
        %898 = vmatprep.subr.mxu0 %v664
        %899 = vmatpush1.msra.mxu0 %v663
        %900 = vmatprep.subr.mxu0 %v667
        %901 = vmatpush1.msra.mxu0 %v666
        %902 = vmatprep.subr.mxu0 %v670
        %903 = vmatpush1.msra.mxu0 %v669
        %904 = vmatprep.subr.mxu0 %v673
        %905 = vmatpush1.msra.mxu0 %v672
        %906 = vmatprep.subr.mxu0 %v676
        %907 = vmatpush1.msra.mxu0 %v675
        %908 = vmatprep.subr.mxu0 %v679
        %909 = vmatpush1.msra.mxu0 %v678
        %910 = vmatprep.subr.mxu0 %v682
        %911 = vmatpush1.msra.mxu0 %v681
        %912 = vmatprep.subr.mxu0 %v685
        %913 = vmatpush1.msra.mxu0 %v684
        %914 = vmatprep.subr.mxu0 %v688
        %915 = vmatpush1.msra.mxu0 %v687
        %916 = vmatprep.subr.mxu0 %v691
        %917 = vmatpush1.msra.mxu0 %v690
        %918 = vmatprep.subr.mxu0 %v694
        %919 = vmatpush1.msra.mxu0 %v693
        %920 = vmatprep.subr.mxu0 %v697
        %921 = vmatpush1.msra.mxu0 %v696
        %922 = vmatprep.subr.mxu0 %v700
        %923 = vmatpush1.msra.mxu0 %v699
        %924 = vmatprep.subr.mxu0 %v703
        %925 = vmatpush1.msra.mxu0 %v702
        %926 = vmatprep.subr.mxu0 %v706
        %927 = vmatpush1.msra.mxu0 %v705
        %928 = vmatprep.subr.mxu0 0.0
        %929 = vmatpush1.msra.mxu0 0.0
        %930 = vmatprep.subr.mxu0 0.0
        %931 = vmatpush1.msra.mxu0 0.0
        %932 = vmatprep.subr.mxu0 0.0
        %933 = vmatpush1.msra.mxu0 0.0
        %934 = vmatprep.subr.mxu0 0.0
        %935 = vmatpush1.msra.mxu0 0.0
        %936 = vmatprep.subr.mxu0 0.0
        %937 = vmatpush1.msra.mxu0 0.0
        %938 = vmatprep.subr.mxu0 0.0
        %939 = vmatpush1.msra.mxu0 0.0
        %940 = vmatprep.subr.mxu0 0.0
        %941 = vmatpush1.msra.mxu0 0.0
        %942 = vmatprep.subr.mxu0 0.0
        %943 = vmatpush1.msra.mxu0 0.0
        %944 = vmatprep.subr.mxu0 0.0
        %945 = vmatpush1.msra.mxu0 0.0
        %946 = vmatprep.subr.mxu0 0.0
        %947 = vmatpush1.msra.mxu0 0.0
        %948 = vmatprep.subr.mxu0 0.0
        %949 = vmatpush1.msra.mxu0 0.0
        %950 = vmatprep.subr.mxu0 0.0
        %951 = vmatpush1.msra.mxu0 0.0
        %952 = vmatprep.subr.mxu0 0.0
        %953 = vmatpush1.msra.mxu0 0.0
        %954 = vmatprep.subr.mxu0 0.0
        %955 = vmatpush1.msra.mxu0 0.0
        %956 = vmatprep.subr.mxu0 0.0
        %957 = vmatpush1.msra.mxu0 0.0
        %958 = vmatprep.subr.mxu0 0.0
        %959 = vmatpush1.msra.mxu0 0.0
        %960 = vmatprep.mubr.f32.mxu0 0.0
        %961 = vmatmul.mubr.f32.gmra.mrb[0].mxu0 %v888
        %v962 = vpop.f32.mrb[0].mxu0
        %v963 = vadd.f32 0.0, %v962
        %v964 = vpop.f32.mrb[0].mxu0
        %v965 = vadd.f32 0.0, %v964
        %966 = vdwg.mxu0
        %967 = vmatprep.subr.mxu0 0.0
        %968 = vmatpush1.msra.mxu0 %v662
        %969 = vmatprep.subr.mxu0 0.0
        %970 = vmatpush1.msra.mxu0 %v665
        %971 = vmatprep.subr.mxu0 0.0
        %972 = vmatpush1.msra.mxu0 %v668
        %973 = vmatprep.subr.mxu0 0.0
        %974 = vmatpush1.msra.mxu0 %v671
        %975 = vmatprep.subr.mxu0 0.0
        %976 = vmatpush1.msra.mxu0 %v674
        %977 = vmatprep.subr.mxu0 0.0
        %978 = vmatpush1.msra.mxu0 %v677
        %979 = vmatprep.subr.mxu0 0.0
        %980 = vmatpush1.msra.mxu0 %v680
        %981 = vmatprep.subr.mxu0 0.0
        %982 = vmatpush1.msra.mxu0 %v683
        %983 = vmatprep.subr.mxu0 0.0
        %984 = vmatpush1.msra.mxu0 %v686
        %985 = vmatprep.subr.mxu0 0.0
        %986 = vmatpush1.msra.mxu0 %v689
        %987 = vmatprep.subr.mxu0 0.0
        %988 = vmatpush1.msra.mxu0 %v692
        %989 = vmatprep.subr.mxu0 0.0
        %990 = vmatpush1.msra.mxu0 %v695
        %991 = vmatprep.subr.mxu0 0.0
        %992 = vmatpush1.msra.mxu0 %v698
        %993 = vmatprep.subr.mxu0 0.0
        %994 = vmatpush1.msra.mxu0 %v701
        %995 = vmatprep.subr.mxu0 0.0
        %996 = vmatpush1.msra.mxu0 %v704
        %997 = vmatprep.subr.mxu0 0.0
        %998 = vmatpush1.msra.mxu0 %v707
        %999 = vmatprep.subr.mxu0 0.0
        %1000 = vmatpush1.msra.mxu0 0.0
        %1001 = vmatprep.subr.mxu0 0.0
        %1002 = vmatpush1.msra.mxu0 0.0
        %1003 = vmatprep.subr.mxu0 0.0
        %1004 = vmatpush1.msra.mxu0 0.0
        %1005 = vmatprep.subr.mxu0 0.0
        %1006 = vmatpush1.msra.mxu0 0.0
        %1007 = vmatprep.subr.mxu0 0.0
        %1008 = vmatpush1.msra.mxu0 0.0
        %1009 = vmatprep.subr.mxu0 0.0
        %1010 = vmatpush1.msra.mxu0 0.0
        %1011 = vmatprep.subr.mxu0 0.0
        %1012 = vmatpush1.msra.mxu0 0.0
        %1013 = vmatprep.subr.mxu0 0.0
        %1014 = vmatpush1.msra.mxu0 0.0
        %1015 = vmatprep.subr.mxu0 0.0
        %1016 = vmatpush1.msra.mxu0 0.0
        %1017 = vmatprep.subr.mxu0 0.0
        %1018 = vmatpush1.msra.mxu0 0.0
        %1019 = vmatprep.subr.mxu0 0.0
        %1020 = vmatpush1.msra.mxu0 0.0
        %1021 = vmatprep.subr.mxu0 0.0
        %1022 = vmatpush1.msra.mxu0 0.0
        %1023 = vmatprep.subr.mxu0 0.0
        %1024 = vmatpush1.msra.mxu0 0.0
        %1025 = vmatprep.subr.mxu0 0.0
        %1026 = vmatpush1.msra.mxu0 0.0
        %1027 = vmatprep.subr.mxu0 0.0
        %1028 = vmatpush1.msra.mxu0 0.0
        %1029 = vmatprep.subr.mxu0 0.0
        %1030 = vmatpush1.msra.mxu0 0.0
        %1031 = vmatprep.mubr.f32.mxu0 0.0
        %1032 = vmatmul.mubr.f32.gmra.mrb[0].mxu0 %v888
        %v1033 = vpop.f32.mrb[0].mxu0
        %v1034 = vadd.f32 0.0, %v1033
        %v1035 = vpop.f32.mrb[0].mxu0
        %1036 = vdwg.mxu0
        %v1037 = vadd.f32 %v893, %v963
        %v1038 = vxor.u32 %v1037, 2147483648
        %v1039 = vmul.f32 %v1038, 1.442695
        %v1040 = vpow.pop %v1039
        %v1041 = vadd.f32 %v1040, 1.0
        %v1042 = vrcp.pop %v1041
        %v1043 = vmul.f32 1.0, %v1042
        %v1044 = vadd.f32 %v894, %v965
        %v1045 = vxor.u32 %v1044, 2147483648
        %v1046 = vmul.f32 %v1045, 1.442695
        %v1047 = vpow.pop %v1046
        %v1048 = vadd.f32 %v1047, 1.0
        %v1049 = vrcp.pop %v1048
        %v1050 = vmul.f32 1.0, %v1049
        %v1051 = vadd.f32 %v1034, %v867
        %v1052 = vmul.f32 %v1043, %v1051
        %v1053 = vadd.f32 %v895, %v1052
        %v1054 = vtanh.pop %v1053
        %v1055 = vsub.f32 1.0, %v1050
        %v1056 = vmul.f32 %v1055, %v1054
        %v1057 = vmul.f32 %v1050, %v888
        %v1058 = vadd.f32 %v1056, %v1057
        %s1059 = ssub.s32 6, %s652
        %v1060 = vstv %s1059
        %v1061 = vsel %vm878, %v1060, 1073741824
        %v1062 = vstv %s889
        %v1063 = vsel %vm877, %v1062, %v1061
        %vm1064 = vcmp.gt.s32.totalorder %v886, %v1063
        %v1065 = vsel %vm1064, %v1058, %v888
        %s1066 = sadd.s32 %s652, 2
        %s1067 = smul.u32 2, 3
        %s1068 = smul.addr %s1067, 8
        %s1069 = scalar_lea.vmem [#allocation3], %s1068
        %v1070 = vld [vmem:[%s1069] sm:$0xff]
        %v1071 = vld [vmem:[%s1069 + $0x8] sm:$0xff]
        %v1072 = vld [vmem:[%s1069 + $0x10] sm:$0xff]
        %1073 = vmatprep.subr.mxu0 %v661
        %1074 = vmatpush1.msra.mxu0 %v660
        %1075 = vmatprep.subr.mxu0 %v664
        %1076 = vmatpush1.msra.mxu0 %v663
        %1077 = vmatprep.subr.mxu0 %v667
        %1078 = vmatpush1.msra.mxu0 %v666
        %1079 = vmatprep.subr.mxu0 %v670
        %1080 = vmatpush1.msra.mxu0 %v669
        %1081 = vmatprep.subr.mxu0 %v673
        %1082 = vmatpush1.msra.mxu0 %v672
        %1083 = vmatprep.subr.mxu0 %v676
        %1084 = vmatpush1.msra.mxu0 %v675
        %1085 = vmatprep.subr.mxu0 %v679
        %1086 = vmatpush1.msra.mxu0 %v678
        %1087 = vmatprep.subr.mxu0 %v682
        %1088 = vmatpush1.msra.mxu0 %v681
        %1089 = vmatprep.subr.mxu0 %v685
        %1090 = vmatpush1.msra.mxu0 %v684
        %1091 = vmatprep.subr.mxu0 %v688
        %1092 = vmatpush1.msra.mxu0 %v687
        %1093 = vmatprep.subr.mxu0 %v691
        %1094 = vmatpush1.msra.mxu0 %v690
        %1095 = vmatprep.subr.mxu0 %v694
        %1096 = vmatpush1.msra.mxu0 %v693
        %1097 = vmatprep.subr.mxu0 %v697
        %1098 = vmatpush1.msra.mxu0 %v696
        %1099 = vmatprep.subr.mxu0 %v700
        %1100 = vmatpush1.msra.mxu0 %v699
        %1101 = vmatprep.subr.mxu0 %v703
        %1102 = vmatpush1.msra.mxu0 %v702
        %1103 = vmatprep.subr.mxu0 %v706
        %1104 = vmatpush1.msra.mxu0 %v705
        %1105 = vmatprep.subr.mxu0 0.0
        %1106 = vmatpush1.msra.mxu0 0.0
        %1107 = vmatprep.subr.mxu0 0.0
        %1108 = vmatpush1.msra.mxu0 0.0
        %1109 = vmatprep.subr.mxu0 0.0
        %1110 = vmatpush1.msra.mxu0 0.0
        %1111 = vmatprep.subr.mxu0 0.0
        %1112 = vmatpush1.msra.mxu0 0.0
        %1113 = vmatprep.subr.mxu0 0.0
        %1114 = vmatpush1.msra.mxu0 0.0
        %1115 = vmatprep.subr.mxu0 0.0
        %1116 = vmatpush1.msra.mxu0 0.0
        %1117 = vmatprep.subr.mxu0 0.0
        %1118 = vmatpush1.msra.mxu0 0.0
        %1119 = vmatprep.subr.mxu0 0.0
        %1120 = vmatpush1.msra.mxu0 0.0
        %1121 = vmatprep.subr.mxu0 0.0
        %1122 = vmatpush1.msra.mxu0 0.0
        %1123 = vmatprep.subr.mxu0 0.0
        %1124 = vmatpush1.msra.mxu0 0.0
        %1125 = vmatprep.subr.mxu0 0.0
        %1126 = vmatpush1.msra.mxu0 0.0
        %1127 = vmatprep.subr.mxu0 0.0
        %1128 = vmatpush1.msra.mxu0 0.0
        %1129 = vmatprep.subr.mxu0 0.0
        %1130 = vmatpush1.msra.mxu0 0.0
        %1131 = vmatprep.subr.mxu0 0.0
        %1132 = vmatpush1.msra.mxu0 0.0
        %1133 = vmatprep.subr.mxu0 0.0
        %1134 = vmatpush1.msra.mxu0 0.0
        %1135 = vmatprep.subr.mxu0 0.0
        %1136 = vmatpush1.msra.mxu0 0.0
        %1137 = vmatprep.mubr.f32.mxu0 0.0
        %1138 = vmatmul.mubr.f32.gmra.mrb[0].mxu0 %v1065
        %v1139 = vpop.f32.mrb[0].mxu0
        %v1140 = vadd.f32 0.0, %v1139
        %v1141 = vpop.f32.mrb[0].mxu0
        %v1142 = vadd.f32 0.0, %v1141
        %1143 = vdwg.mxu0
        %1144 = vmatprep.subr.mxu0 0.0
        %1145 = vmatpush1.msra.mxu0 %v662
        %1146 = vmatprep.subr.mxu0 0.0
        %1147 = vmatpush1.msra.mxu0 %v665
        %1148 = vmatprep.subr.mxu0 0.0
        %1149 = vmatpush1.msra.mxu0 %v668
        %1150 = vmatprep.subr.mxu0 0.0
        %1151 = vmatpush1.msra.mxu0 %v671
        %1152 = vmatprep.subr.mxu0 0.0
        %1153 = vmatpush1.msra.mxu0 %v674
        %1154 = vmatprep.subr.mxu0 0.0
        %1155 = vmatpush1.msra.mxu0 %v677
        %1156 = vmatprep.subr.mxu0 0.0
        %1157 = vmatpush1.msra.mxu0 %v680
        %1158 = vmatprep.subr.mxu0 0.0
        %1159 = vmatpush1.msra.mxu0 %v683
        %1160 = vmatprep.subr.mxu0 0.0
        %1161 = vmatpush1.msra.mxu0 %v686
        %1162 = vmatprep.subr.mxu0 0.0
        %1163 = vmatpush1.msra.mxu0 %v689
        %1164 = vmatprep.subr.mxu0 0.0
        %1165 = vmatpush1.msra.mxu0 %v692
        %1166 = vmatprep.subr.mxu0 0.0
        %1167 = vmatpush1.msra.mxu0 %v695
        %1168 = vmatprep.subr.mxu0 0.0
        %1169 = vmatpush1.msra.mxu0 %v698
        %1170 = vmatprep.subr.mxu0 0.0
        %1171 = vmatpush1.msra.mxu0 %v701
        %1172 = vmatprep.subr.mxu0 0.0
        %1173 = vmatpush1.msra.mxu0 %v704
        %1174 = vmatprep.subr.mxu0 0.0
        %1175 = vmatpush1.msra.mxu0 %v707
        %1176 = vmatprep.subr.mxu0 0.0
        %1177 = vmatpush1.msra.mxu0 0.0
        %1178 = vmatprep.subr.mxu0 0.0
        %1179 = vmatpush1.msra.mxu0 0.0
        %1180 = vmatprep.subr.mxu0 0.0
        %1181 = vmatpush1.msra.mxu0 0.0
        %1182 = vmatprep.subr.mxu0 0.0
        %1183 = vmatpush1.msra.mxu0 0.0
        %1184 = vmatprep.subr.mxu0 0.0
        %1185 = vmatpush1.msra.mxu0 0.0
        %1186 = vmatprep.subr.mxu0 0.0
        %1187 = vmatpush1.msra.mxu0 0.0
        %1188 = vmatprep.subr.mxu0 0.0
        %1189 = vmatpush1.msra.mxu0 0.0
        %1190 = vmatprep.subr.mxu0 0.0
        %1191 = vmatpush1.msra.mxu0 0.0
        %1192 = vmatprep.subr.mxu0 0.0
        %1193 = vmatpush1.msra.mxu0 0.0
        %1194 = vmatprep.subr.mxu0 0.0
        %1195 = vmatpush1.msra.mxu0 0.0
        %1196 = vmatprep.subr.mxu0 0.0
        %1197 = vmatpush1.msra.mxu0 0.0
        %1198 = vmatprep.subr.mxu0 0.0
        %1199 = vmatpush1.msra.mxu0 0.0
        %1200 = vmatprep.subr.mxu0 0.0
        %1201 = vmatpush1.msra.mxu0 0.0
        %1202 = vmatprep.subr.mxu0 0.0
        %1203 = vmatpush1.msra.mxu0 0.0
        %1204 = vmatprep.subr.mxu0 0.0
        %1205 = vmatpush1.msra.mxu0 0.0
        %1206 = vmatprep.subr.mxu0 0.0
        %1207 = vmatpush1.msra.mxu0 0.0
        %1208 = vmatprep.mubr.f32.mxu0 0.0
        %1209 = vmatmul.mubr.f32.gmra.mrb[0].mxu0 %v1065
        %v1210 = vpop.f32.mrb[0].mxu0
        %v1211 = vadd.f32 0.0, %v1210
        %v1212 = vpop.f32.mrb[0].mxu0
        %1213 = vdwg.mxu0
        %v1214 = vadd.f32 %v1070, %v1140
        %v1215 = vxor.u32 %v1214, 2147483648
        %v1216 = vmul.f32 %v1215, 1.442695
        %v1217 = vpow.pop %v1216
        %v1218 = vadd.f32 %v1217, 1.0
        %v1219 = vrcp.pop %v1218
        %v1220 = vmul.f32 1.0, %v1219
        %v1221 = vadd.f32 %v1071, %v1142
        %v1222 = vxor.u32 %v1221, 2147483648
        %v1223 = vmul.f32 %v1222, 1.442695
        %v1224 = vpow.pop %v1223
        %v1225 = vadd.f32 %v1224, 1.0
        %v1226 = vrcp.pop %v1225
        %v1227 = vmul.f32 1.0, %v1226
        %v1228 = vadd.f32 %v1211, %v867
        %v1229 = vmul.f32 %v1220, %v1228
        %v1230 = vadd.f32 %v1072, %v1229
        %v1231 = vtanh.pop %v1230
        %v1232 = vsub.f32 1.0, %v1227
        %v1233 = vmul.f32 %v1232, %v1231
        %v1234 = vmul.f32 %v1227, %v1065
        %v1235 = vadd.f32 %v1233, %v1234
        %s1236 = ssub.s32 5, %s652
        %v1237 = vstv %s1236
        %v1238 = vsel %vm878, %v1237, 1073741824
        %v1239 = vstv %s1066
        %v1240 = vsel %vm877, %v1239, %v1238
        %vm1241 = vcmp.gt.s32.totalorder %v886, %v1240
        %v1242 = vsel %vm1241, %v1235, %v1065
        %s1243 = sadd.s32 %s652, 3
        %s1244 = smul.u32 3, 3
        %s1245 = smul.addr %s1244, 8
        %s1246 = scalar_lea.vmem [#allocation3], %s1245
        %v1247 = vld [vmem:[%s1246] sm:$0xff]
        %v1248 = vld [vmem:[%s1246 + $0x8] sm:$0xff]
        %v1249 = vld [vmem:[%s1246 + $0x10] sm:$0xff]
        %1250 = vmatprep.subr.mxu0 %v661
        %1251 = vmatpush1.msra.mxu0 %v660
        %1252 = vmatprep.subr.mxu0 %v664
        %1253 = vmatpush1.msra.mxu0 %v663
        %1254 = vmatprep.subr.mxu0 %v667
        %1255 = vmatpush1.msra.mxu0 %v666
        %1256 = vmatprep.subr.mxu0 %v670
        %1257 = vmatpush1.msra.mxu0 %v669
        %1258 = vmatprep.subr.mxu0 %v673
        %1259 = vmatpush1.msra.mxu0 %v672
        %1260 = vmatprep.subr.mxu0 %v676
        %1261 = vmatpush1.msra.mxu0 %v675
        %1262 = vmatprep.subr.mxu0 %v679
        %1263 = vmatpush1.msra.mxu0 %v678
        %1264 = vmatprep.subr.mxu0 %v682
        %1265 = vmatpush1.msra.mxu0 %v681
        %1266 = vmatprep.subr.mxu0 %v685
        %1267 = vmatpush1.msra.mxu0 %v684
        %1268 = vmatprep.subr.mxu0 %v688
        %1269 = vmatpush1.msra.mxu0 %v687
        %1270 = vmatprep.subr.mxu0 %v691
        %1271 = vmatpush1.msra.mxu0 %v690
        %1272 = vmatprep.subr.mxu0 %v694
        %1273 = vmatpush1.msra.mxu0 %v693
        %1274 = vmatprep.subr.mxu0 %v697
        %1275 = vmatpush1.msra.mxu0 %v696
        %1276 = vmatprep.subr.mxu0 %v700
        %1277 = vmatpush1.msra.mxu0 %v699
        %1278 = vmatprep.subr.mxu0 %v703
        %1279 = vmatpush1.msra.mxu0 %v702
        %1280 = vmatprep.subr.mxu0 %v706
        %1281 = vmatpush1.msra.mxu0 %v705
        %1282 = vmatprep.subr.mxu0 0.0
        %1283 = vmatpush1.msra.mxu0 0.0
        %1284 = vmatprep.subr.mxu0 0.0
        %1285 = vmatpush1.msra.mxu0 0.0
        %1286 = vmatprep.subr.mxu0 0.0
        %1287 = vmatpush1.msra.mxu0 0.0
        %1288 = vmatprep.subr.mxu0 0.0
        %1289 = vmatpush1.msra.mxu0 0.0
        %1290 = vmatprep.subr.mxu0 0.0
        %1291 = vmatpush1.msra.mxu0 0.0
        %1292 = vmatprep.subr.mxu0 0.0
        %1293 = vmatpush1.msra.mxu0 0.0
        %1294 = vmatprep.subr.mxu0 0.0
        %1295 = vmatpush1.msra.mxu0 0.0
        %1296 = vmatprep.subr.mxu0 0.0
        %1297 = vmatpush1.msra.mxu0 0.0
        %1298 = vmatprep.subr.mxu0 0.0
        %1299 = vmatpush1.msra.mxu0 0.0
        %1300 = vmatprep.subr.mxu0 0.0
        %1301 = vmatpush1.msra.mxu0 0.0
        %1302 = vmatprep.subr.mxu0 0.0
        %1303 = vmatpush1.msra.mxu0 0.0
        %1304 = vmatprep.subr.mxu0 0.0
        %1305 = vmatpush1.msra.mxu0 0.0
        %1306 = vmatprep.subr.mxu0 0.0
        %1307 = vmatpush1.msra.mxu0 0.0
        %1308 = vmatprep.subr.mxu0 0.0
        %1309 = vmatpush1.msra.mxu0 0.0
        %1310 = vmatprep.subr.mxu0 0.0
        %1311 = vmatpush1.msra.mxu0 0.0
        %1312 = vmatprep.subr.mxu0 0.0
        %1313 = vmatpush1.msra.mxu0 0.0
        %1314 = vmatprep.mubr.f32.mxu0 0.0
        %1315 = vmatmul.mubr.f32.gmra.mrb[0].mxu0 %v1242
        %v1316 = vpop.f32.mrb[0].mxu0
        %v1317 = vadd.f32 0.0, %v1316
        %v1318 = vpop.f32.mrb[0].mxu0
        %v1319 = vadd.f32 0.0, %v1318
        %1320 = vdwg.mxu0
        %1321 = vmatprep.subr.mxu0 0.0
        %1322 = vmatpush1.msra.mxu0 %v662
        %1323 = vmatprep.subr.mxu0 0.0
        %1324 = vmatpush1.msra.mxu0 %v665
        %1325 = vmatprep.subr.mxu0 0.0
        %1326 = vmatpush1.msra.mxu0 %v668
        %1327 = vmatprep.subr.mxu0 0.0
        %1328 = vmatpush1.msra.mxu0 %v671
        %1329 = vmatprep.subr.mxu0 0.0
        %1330 = vmatpush1.msra.mxu0 %v674
        %1331 = vmatprep.subr.mxu0 0.0
        %1332 = vmatpush1.msra.mxu0 %v677
        %1333 = vmatprep.subr.mxu0 0.0
        %1334 = vmatpush1.msra.mxu0 %v680
        %1335 = vmatprep.subr.mxu0 0.0
        %1336 = vmatpush1.msra.mxu0 %v683
        %1337 = vmatprep.subr.mxu0 0.0
        %1338 = vmatpush1.msra.mxu0 %v686
        %1339 = vmatprep.subr.mxu0 0.0
        %1340 = vmatpush1.msra.mxu0 %v689
        %1341 = vmatprep.subr.mxu0 0.0
        %1342 = vmatpush1.msra.mxu0 %v692
        %1343 = vmatprep.subr.mxu0 0.0
        %1344 = vmatpush1.msra.mxu0 %v695
        %1345 = vmatprep.subr.mxu0 0.0
        %1346 = vmatpush1.msra.mxu0 %v698
        %1347 = vmatprep.subr.mxu0 0.0
        %1348 = vmatpush1.msra.mxu0 %v701
        %1349 = vmatprep.subr.mxu0 0.0
        %1350 = vmatpush1.msra.mxu0 %v704
        %1351 = vmatprep.subr.mxu0 0.0
        %1352 = vmatpush1.msra.mxu0 %v707
        %1353 = vmatprep.subr.mxu0 0.0
        %1354 = vmatpush1.msra.mxu0 0.0
        %1355 = vmatprep.subr.mxu0 0.0
        %1356 = vmatpush1.msra.mxu0 0.0
        %1357 = vmatprep.subr.mxu0 0.0
        %1358 = vmatpush1.msra.mxu0 0.0
        %1359 = vmatprep.subr.mxu0 0.0
        %1360 = vmatpush1.msra.mxu0 0.0
        %1361 = vmatprep.subr.mxu0 0.0
        %1362 = vmatpush1.msra.mxu0 0.0
        %1363 = vmatprep.subr.mxu0 0.0
        %1364 = vmatpush1.msra.mxu0 0.0
        %1365 = vmatprep.subr.mxu0 0.0
        %1366 = vmatpush1.msra.mxu0 0.0
        %1367 = vmatprep.subr.mxu0 0.0
        %1368 = vmatpush1.msra.mxu0 0.0
        %1369 = vmatprep.subr.mxu0 0.0
        %1370 = vmatpush1.msra.mxu0 0.0
        %1371 = vmatprep.subr.mxu0 0.0
        %1372 = vmatpush1.msra.mxu0 0.0
        %1373 = vmatprep.subr.mxu0 0.0
        %1374 = vmatpush1.msra.mxu0 0.0
        %1375 = vmatprep.subr.mxu0 0.0
        %1376 = vmatpush1.msra.mxu0 0.0
        %1377 = vmatprep.subr.mxu0 0.0
        %1378 = vmatpush1.msra.mxu0 0.0
        %1379 = vmatprep.subr.mxu0 0.0
        %1380 = vmatpush1.msra.mxu0 0.0
        %1381 = vmatprep.subr.mxu0 0.0
        %1382 = vmatpush1.msra.mxu0 0.0
        %1383 = vmatprep.subr.mxu0 0.0
        %1384 = vmatpush1.msra.mxu0 0.0
        %1385 = vmatprep.mubr.f32.mxu0 0.0
        %1386 = vmatmul.mubr.f32.gmra.mrb[0].mxu0 %v1242
        %v1387 = vpop.f32.mrb[0].mxu0
        %v1388 = vadd.f32 0.0, %v1387
        %v1389 = vpop.f32.mrb[0].mxu0
        %1390 = vdwg.mxu0
        %v1391 = vadd.f32 %v1247, %v1317
        %v1392 = vxor.u32 %v1391, 2147483648
        %v1393 = vmul.f32 %v1392, 1.442695
        %v1394 = vpow.pop %v1393
        %v1395 = vadd.f32 %v1394, 1.0
        %v1396 = vrcp.pop %v1395
        %v1397 = vmul.f32 1.0, %v1396
        %v1398 = vadd.f32 %v1248, %v1319
        %v1399 = vxor.u32 %v1398, 2147483648
        %v1400 = vmul.f32 %v1399, 1.442695
        %v1401 = vpow.pop %v1400
        %v1402 = vadd.f32 %v1401, 1.0
        %v1403 = vrcp.pop %v1402
        %v1404 = vmul.f32 1.0, %v1403
        %v1405 = vadd.f32 %v1388, %v867
        %v1406 = vmul.f32 %v1397, %v1405
        %v1407 = vadd.f32 %v1249, %v1406
        %v1408 = vtanh.pop %v1407
        %v1409 = vsub.f32 1.0, %v1404
        %v1410 = vmul.f32 %v1409, %v1408
        %v1411 = vmul.f32 %v1404, %v1242
        %v1412 = vadd.f32 %v1410, %v1411
        %s1413 = ssub.s32 4, %s652
        %v1414 = vstv %s1413
        %v1415 = vsel %vm878, %v1414, 1073741824
        %v1416 = vstv %s1243
        %v1417 = vsel %vm877, %v1416, %v1415
        %vm1418 = vcmp.gt.s32.totalorder %v886, %v1417
        %v1419 = vsel %vm1418, %v1412, %v1242
        %1420 = vst [vmem:[#allocation2] sm:$0xff] %v1419
        %p1421 = scmp.eq.s32.totalorder %s30, 1
        // Predicated region
        $region73: #{tpu_custom_call.1} parent=51 // pred_check
          %p1422 = pneg %p1421
        $region74: #{tpu_custom_call.1} parent=51 // pred_check_branch
          %1424 = sbr.rel (%p1422) target = $region76
        $region75: #{tpu_custom_call.1} parent=51 // pred_region
          %v1425 = vld [vmem:[#allocation10] sm:$0xff]
          %v1426 = vld [vmem:[#allocation10 + $0x8] sm:$0xff]
          %v1427 = vld [vmem:[#allocation10 + $0x10] sm:$0xff]
          %v1428 = vld [vmem:[#allocation10 + $0x18] sm:$0xff]
          %v1429 = vld [vmem:[#allocation10 + $0x20] sm:$0xff]
          %v1430 = vld [vmem:[#allocation10 + $0x28] sm:$0xff]
          %v1431 = vld [vmem:[#allocation10 + $0x30] sm:$0xff]
          %v1432 = vld [vmem:[#allocation10 + $0x38] sm:$0xff]
          %v1433 = vld [vmem:[#allocation10 + $0x40] sm:$0xff]
          %v1434 = vld [vmem:[#allocation10 + $0x48] sm:$0xff]
          %v1435 = vld [vmem:[#allocation10 + $0x50] sm:$0xff]
          %v1436 = vld [vmem:[#allocation10 + $0x58] sm:$0xff]
          %v1437 = vld [vmem:[#allocation10 + $0x60] sm:$0xff]
          %v1438 = vld [vmem:[#allocation10 + $0x68] sm:$0xff]
          %v1439 = vld [vmem:[#allocation10 + $0x70] sm:$0xff]
          %v1440 = vld [vmem:[#allocation10 + $0x78] sm:$0xff]
          %v1441 = vld [vmem:[%s7] sm:$0x1]
          %v1443 = vlaneseq
          %v1444 = vshrl.u32 %v1443, 7
          %v1445 = vsub.s32 0, %v1444
          %v1446 = vrot.slane %v1441, %v1445
          %1448 = vmatprep.subr.mxu0 0.0
          %1449 = vmatpush1.msra.mxu0 %v1425
          %1450 = vmatprep.subr.mxu0 0.0
          %1451 = vmatpush1.msra.mxu0 %v1426
          %1452 = vmatprep.subr.mxu0 0.0
          %1453 = vmatpush1.msra.mxu0 %v1427
          %1454 = vmatprep.subr.mxu0 0.0
          %1455 = vmatpush1.msra.mxu0 %v1428
          %1456 = vmatprep.subr.mxu0 0.0
          %1457 = vmatpush1.msra.mxu0 %v1429
          %1458 = vmatprep.subr.mxu0 0.0
          %1459 = vmatpush1.msra.mxu0 %v1430
          %1460 = vmatprep.subr.mxu0 0.0
          %1461 = vmatpush1.msra.mxu0 %v1431
          %1462 = vmatprep.subr.mxu0 0.0
          %1463 = vmatpush1.msra.mxu0 %v1432
          %1464 = vmatprep.subr.mxu0 0.0
          %1465 = vmatpush1.msra.mxu0 %v1433
          %1466 = vmatprep.subr.mxu0 0.0
          %1467 = vmatpush1.msra.mxu0 %v1434
          %1468 = vmatprep.subr.mxu0 0.0
          %1469 = vmatpush1.msra.mxu0 %v1435
          %1470 = vmatprep.subr.mxu0 0.0
          %1471 = vmatpush1.msra.mxu0 %v1436
          %1472 = vmatprep.subr.mxu0 0.0
          %1473 = vmatpush1.msra.mxu0 %v1437
          %1474 = vmatprep.subr.mxu0 0.0
          %1475 = vmatpush1.msra.mxu0 %v1438
          %1476 = vmatprep.subr.mxu0 0.0
          %1477 = vmatpush1.msra.mxu0 %v1439
          %1478 = vmatprep.subr.mxu0 0.0
          %1479 = vmatpush1.msra.mxu0 %v1440
          %1480 = vmatprep.subr.mxu0 0.0
          %1481 = vmatpush1.msra.mxu0 0.0
          %1482 = vmatprep.subr.mxu0 0.0
          %1483 = vmatpush1.msra.mxu0 0.0
          %1484 = vmatprep.subr.mxu0 0.0
          %1485 = vmatpush1.msra.mxu0 0.0
          %1486 = vmatprep.subr.mxu0 0.0
          %1487 = vmatpush1.msra.mxu0 0.0
          %1488 = vmatprep.subr.mxu0 0.0
          %1489 = vmatpush1.msra.mxu0 0.0
          %1490 = vmatprep.subr.mxu0 0.0
          %1491 = vmatpush1.msra.mxu0 0.0
          %1492 = vmatprep.subr.mxu0 0.0
          %1493 = vmatpush1.msra.mxu0 0.0
          %1494 = vmatprep.subr.mxu0 0.0
          %1495 = vmatpush1.msra.mxu0 0.0
          %1496 = vmatprep.subr.mxu0 0.0
          %1497 = vmatpush1.msra.mxu0 0.0
          %1498 = vmatprep.subr.mxu0 0.0
          %1499 = vmatpush1.msra.mxu0 0.0
          %1500 = vmatprep.subr.mxu0 0.0
          %1501 = vmatpush1.msra.mxu0 0.0
          %1502 = vmatprep.subr.mxu0 0.0
          %1503 = vmatpush1.msra.mxu0 0.0
          %1504 = vmatprep.subr.mxu0 0.0
          %1505 = vmatpush1.msra.mxu0 0.0
          %1506 = vmatprep.subr.mxu0 0.0
          %1507 = vmatpush1.msra.mxu0 0.0
          %1508 = vmatprep.subr.mxu0 0.0
          %1509 = vmatpush1.msra.mxu0 0.0
          %1510 = vmatprep.subr.mxu0 0.0
          %1511 = vmatpush1.msra.mxu0 0.0
          %1512 = vmatprep.mubr.f32.mxu0 0.0
          %1513 = vmatmul.mubr.f32.gmra.mrb[0].mxu0 %v1419
          %v1514 = vpop.f32.mrb[0].mxu0
          %v1515 = vadd.f32 %v1446, %v1514
          %v1516 = vpop.f32.mrb[0].mxu0
          %1517 = vdwg.mxu0
          %1518 = vst [vmem:[#allocation12] sm:$0xff] %v1515
        $region76: #{tpu_custom_call.1} parent=51 // pred_fallthru
          _
        // Predicated region
        $region77: #{tpu_custom_call.1} parent=51 // pred_check
          %p1519 = pneg %p235
        $region78: #{tpu_custom_call.1} parent=51 // pred_check_branch
          %1521 = sbr.rel (%p1519) target = $region80
        $region79: #{tpu_custom_call.1} parent=51 // pred_region
          %s1523 = ssub.s32 128, 128
          %1524 = vsyncadd [#allocation6], %s1523
          %s1525 = smul.addr %s29, 128
          %s1526 = scalar_lea.hbm %s8, %s1525
          %s1528 = sshll.u32 [#allocation12], 4
          %s1529 = int_to_ptr.vmem [resolvable:$true] %s1528
          %1531 = dma.vmem_to_hbm [thread:$0]  %s1529, 128, %s1526, [#allocation6]
        $region80: #{tpu_custom_call.1} parent=51 // pred_fallthru
          _
        // Predicated region
        $region81: #{tpu_custom_call.1} parent=51 // pred_check
          %p1532 = pneg %p235
        $region82: #{tpu_custom_call.1} parent=51 // pred_check_branch
          %1534 = sbr.rel (%p1532) target = $region84
        $region83: #{tpu_custom_call.1} parent=51 // pred_region
          %1535 = dma.done [#allocation6], 128
        $region84: #{tpu_custom_call.1} parent=51 // pred_fallthru
          _
      $region52: #{tpu_custom_call.1} parent=5 // pred_fallthru
        _
      %p1536 = scmp.le.s32.totalorder 2, %s20
      // Predicated region
      $region85: #{tpu_custom_call.1} parent=5 // pred_check
        %p1537 = pneg %p1536
      $region86: #{tpu_custom_call.1} parent=5 // pred_check_branch
        %1539 = sbr.rel (%p1537) target = $region88
      $region87: #{tpu_custom_call.1} parent=5 // pred_region
        %s1540 = ssub.s32 %s20, 2
      $region88: #{tpu_custom_call.1} parent=5 // pred_fallthru
        _
    $region6: #{tpu_custom_call.1} parent=1 // loop_footer
      %s24 = sadd.s32 1, %s20
    $region7: #{tpu_custom_call.1} parent=1 // loop_footer_branch
      %19 = sbr.rel target = $region3
    $region8: #{tpu_custom_call.1} parent=1 // loop_exit
      _
    %1541 = vsyncpa [#allocation5], 1
    %s1542 = scalar_lea.sflag [#allocation5], 1
    %1543 = vsyncpa %s1542, 1
    %1544 = vsyncpa [#allocation8], 1
    %1545 = vsyncpa [#allocation11], 1
    %1546 = vsyncpa [#allocation6], 1
    %s1547 = scalar_lea.sflag [#allocation6], 1
    %1548 = vsyncpa %s1547, 1

</llo_original>
